<compile_context>
chip_gen: v7x
topology: tpu7x:2x2x1
jax: 0.10.0
libtpu: 0.0.40
codegen_flags: <defaults>
</compile_context>

<pallas_src>
import functools

import jax
import jax.numpy as jnp
from jax.experimental import pallas as pl
from jax.experimental.pallas import tpu as pltpu

DEFAULT_UNIQUE_RADII = [0.14, 0.117, 0.155, 0.15, 0.21, 0.185, 0.18, 0.17, 0.12, 0.13]

OFFSET = 0.0195141            # dielectric offset (nm)
KE = 138.935456               # Coulomb constant kJ*nm/(mol*e^2)
GB_RADIUS = 10.0              # GB-Neck graph cutoff (nm)
GNN_RADIUS = 0.4              # GNN graph cutoff (nm)
PW_EPS = 1e-6                 # torch.nn.PairwiseDistance eps (added per component)
OBC_ALPHA, OBC_BETA, OBC_GAMMA = 1.0, 0.8, 4.85
VMEM_LIMIT = 48 * 1024 * 1024  # safe on v5e/v6e (128 MiB) and v7x (64 MiB)


def _round_up(n, m):
    return ((n + m - 1) // m) * m


def _pick_chunk(n_pad, cap):
    for c in (512, 256, 128):
        if c <= cap and n_pad % c == 0:
            return c
    return 128


def _compiler_params():
    return pltpu.CompilerParams(
        dimension_semantics=("parallel", "arbitrary"),
        vmem_limit_bytes=VMEM_LIMIT)


# ----------------------------------------------------------------------------
# kernel 1: GBNeck_interaction (descreening sum -> Born radii)
# pair layout: [chunk_src (sublanes), tile_tgt (lanes)]
# ----------------------------------------------------------------------------
def born_kernel(posT_t_ref, parT_t_ref, rep_t_ref,       # target (rows, N on lanes)
                pos_s_ref, par_s_ref, rep_s_ref,          # source chunk (columns)
                bcT_ref, isum_ref, *, gb_radius2):
    i = pl.program_id(0)
    c = pl.program_id(1)
    T = posT_t_ref.shape[1]
    NC = pos_s_ref.shape[0]

    @pl.when(c == 0)
    def _():
        isum_ref[...] = jnp.zeros_like(isum_ref)

    # target rows [1, T]
    px_t = posT_t_ref[0:1, :]
    py_t = posT_t_ref[1:2, :]
    pz_t = posT_t_ref[2:3, :]
    q_t = parT_t_ref[0:1, :]
    or_t = parT_t_ref[1:2, :]
    inv_or_t = 1.0 / or_t
    rep_t = rep_t_ref[...]                                # [1, T] int32

    # source columns [NC, 1]
    pos_s = pos_s_ref[...]
    sr_s = par_s_ref[:, 2:3]
    rep_s = rep_s_ref[...]                                # [NC, 1] int32

    dx = pos_s[:, 0:1] - px_t + PW_EPS                    # [NC, T]
    dy = pos_s[:, 1:2] - py_t + PW_EPS
    dz = pos_s[:, 2:3] - pz_t + PW_EPS
    d2 = dx * dx + dy * dy + dz * dz

    src_idx = c * NC + jax.lax.broadcasted_iota(jnp.int32, (NC, T), 0)
    tgt_idx = i * T + jax.lax.broadcasted_iota(jnp.int32, (NC, T), 1)
    mask = (rep_s == rep_t) & (src_idx != tgt_idx) & (d2 < gb_radius2)

    d = jnp.where(mask, jnp.sqrt(d2), 1.0)
    inv_d = 1.0 / d

    # HCT pairwise descreening integral of source j on target i.
    U = d + sr_s
    L = jnp.maximum(jnp.abs(d - sr_s), or_t)
    inv_LU = 1.0 / (L * U)                                # one divide -> both recips
    inv_L = U * inv_LU
    inv_U = L * inv_LU
    I = 0.5 * (inv_L - inv_U
               + 0.25 * (d - sr_s * sr_s * inv_d) * (inv_U * inv_U - inv_L * inv_L)
               + 0.5 * inv_d * jnp.log(L * inv_U))
    I = I + jnp.where(or_t < sr_s - d, 2.0 * (inv_or_t - inv_L), 0.0)
    I = jnp.where(mask & (or_t < U), I, 0.0)

    isum_ref[...] += jnp.sum(I, axis=0, keepdims=True)    # [1, T]

    @pl.when(c == pl.num_programs(1) - 1)
    def _():
        # TODO(synk): GB-Neck2 uses per-element alpha/beta/gamma and a neck term;
        # layer source not provided, scalar OBC2 constants are used instead.
        psi = isum_ref[...] * or_t
        tanh_arg = OBC_ALPHA * psi - OBC_BETA * psi * psi + OBC_GAMMA * psi * psi * psi
        born = 1.0 / (inv_or_t - jnp.tanh(tanh_arg) / (or_t + OFFSET))
        bcT_ref[0:1, :] = born                            # lane-dense [2, T] output
        bcT_ref[1:2, :] = q_t


def aggregate_information(posT, parT, rep_row, pos, par, rep_col, *, tile, chunk):
    n_pad = pos.shape[0]
    return pl.pallas_call(
        functools.partial(born_kernel, gb_radius2=GB_RADIUS * GB_RADIUS),
        out_shape=jax.ShapeDtypeStruct((2, n_pad), jnp.float32),
        grid=(n_pad // tile, n_pad // chunk),
        in_specs=[
            pl.BlockSpec((3, tile), lambda i, c: (0, i)),
            pl.BlockSpec((3, tile), lambda i, c: (0, i)),
            pl.BlockSpec((1, tile), lambda i, c: (0, i)),
            pl.BlockSpec((chunk, 3), lambda i, c: (c, 0)),
            pl.BlockSpec((chunk, 3), lambda i, c: (c, 0)),
            pl.BlockSpec((chunk, 1), lambda i, c: (c, 0)),
        ],
        out_specs=pl.BlockSpec((2, tile), lambda i, c: (0, i)),
        scratch_shapes=[pltpu.VMEM((1, tile), jnp.float32)],
        compiler_params=_compiler_params(),
    )(posT, parT, rep_row, pos, par, rep_col)


# ----------------------------------------------------------------------------
# kernel 2: IN_layer_all_swish_2pass (masked message passing, chunked sources)
# pair layout: [tile_tgt (sublanes), chunk_src (lanes)]
# ----------------------------------------------------------------------------
def interaction_kernel(xa_ref, xbT_ref, w1d_ref, pos_t_ref, posT_s_ref,
                       rep_t_ref, rep_s_ref,
                       hs_ref, cnt_out_ref, hacc_ref, cacc_ref, *, radius2):
    i = pl.program_id(0)
    c = pl.program_id(1)
    T, H = xa_ref.shape
    NC = xbT_ref.shape[1]

    @pl.when(c == 0)
    def _():
        hacc_ref[...] = jnp.zeros_like(hacc_ref)
        cacc_ref[...] = jnp.zeros_like(cacc_ref)

    pos_t = pos_t_ref[...]                                        # [T, 3]
    dx = posT_s_ref[0:1, :] - pos_t[:, 0:1] + PW_EPS               # [T, NC]
    dy = posT_s_ref[1:2, :] - pos_t[:, 1:2] + PW_EPS
    dz = posT_s_ref[2:3, :] - pos_t[:, 2:3] + PW_EPS
    d2 = dx * dx + dy * dy + dz * dz

    tgt_idx = i * T + jax.lax.broadcasted_iota(jnp.int32, (T, NC), 0)
    src_idx = c * NC + jax.lax.broadcasted_iota(jnp.int32, (T, NC), 1)
    mask = (rep_t_ref[...] == rep_s_ref[...]) & (tgt_idx != src_idx) & (d2 < radius2)
    maskf = mask.astype(jnp.float32)
    d = jnp.sqrt(d2)                                               # edge attribute

    # TODO(synk): IN_layer_all_swish_2pass source not provided; reconstructed as
    # message = lin2(SiLU(lin1(cat(x_i, x_j, d)))), aggr='add'.  lin1 is factored as
    # x_i@W1a (xa, hoisted) + x_j@W1b + b1 (xbT, hoisted) + d*w1d; lin2 applied in XLA.
    pre = (xa_ref[...][:, :, None]                                 # [T, H, 1]
           + xbT_ref[...][None, :, :]                              # [1, H, NC]
           + d[:, None, :] * w1d_ref[...][None, :, :])             # [T, H, NC]
    h = pre * jax.nn.sigmoid(pre)                                  # SiLU per message
    hacc_ref[...] += jnp.sum(h * maskf[:, None, :], axis=2)        # [T, H]
    cacc_ref[...] += jnp.sum(maskf, axis=1, keepdims=True)         # [T, 1]

    @pl.when(c == pl.num_programs(1) - 1)
    def _():
        hs_ref[...] = hacc_ref[...]
        cnt_out_ref[...] = cacc_ref[...]


def message_passing(xa, xbT, w1d, pos, posT, rep_col, rep_row, *, tile, chunk, radius2):
    n_pad, H = xa.shape
    return pl.pallas_call(
        functools.partial(interaction_kernel, radius2=radius2),
        out_shape=(jax.ShapeDtypeStruct((n_pad, H), jnp.float32),
                   jax.ShapeDtypeStruct((n_pad, 1), jnp.float32)),
        grid=(n_pad // tile, n_pad // chunk),
        in_specs=[
            pl.BlockSpec((tile, H), lambda i, c: (i, 0)),     # x_i @ W1a
            pl.BlockSpec((H, chunk), lambda i, c: (0, c)),    # (x_j @ W1b + b1)^T
            pl.BlockSpec((H, 1), lambda i, c: (0, 0)),        # w1d (per-hidden)
            pl.BlockSpec((tile, 3), lambda i, c: (i, 0)),     # target positions
            pl.BlockSpec((3, chunk), lambda i, c: (0, c)),    # source positions (rows)
            pl.BlockSpec((tile, 1), lambda i, c: (i, 0)),     # target rep ids
            pl.BlockSpec((1, chunk), lambda i, c: (0, c)),    # source rep ids
        ],
        out_specs=(pl.BlockSpec((tile, H), lambda i, c: (i, 0)),
                   pl.BlockSpec((tile, 1), lambda i, c: (i, 0))),
        scratch_shapes=[pltpu.VMEM((tile, H), jnp.float32),
                        pltpu.VMEM((tile, 1), jnp.float32)],
        compiler_params=_compiler_params(),
    )(xa, xbT, w1d, pos, posT, rep_col, rep_row)


def _interaction(x_nodes, pos, posT, rep_col, rep_row, lw, *, tile, chunk, radius2):
    xa = x_nodes @ lw["w1a"]                          # hoisted invariant matmuls
    xbT = (x_nodes @ lw["w1b"] + lw["b1"]).T          # [H, n_pad], b1 folded in
    hs, cnt = message_passing(xa, xbT, lw["w1d"], pos, posT, rep_col, rep_row,
                              tile=tile, chunk=chunk, radius2=radius2)
    return hs @ lw["w2"] + cnt * lw["b2"]             # lin2 after add-aggregation


# ----------------------------------------------------------------------------
# kernel 3: GBNeck_energies (GB pairwise + self polar energy)
# pair layout: [chunk_src (sublanes), tile_tgt (lanes)]
# ----------------------------------------------------------------------------
def energy_kernel(posT_t_ref, bcT_t_ref, rep_t_ref,
                  pos_s_ref, bc_s_ref, rep_s_ref,
                  eT_ref, psum_ref, *, prefac, gb_radius2):
    i = pl.program_id(0)
    c = pl.program_id(1)
    T = posT_t_ref.shape[1]
    NC = pos_s_ref.shape[0]

    @pl.when(c == 0)
    def _():
        psum_ref[...] = jnp.zeros_like(psum_ref)

    px_t = posT_t_ref[0:1, :]
    py_t = posT_t_ref[1:2, :]
    pz_t = posT_t_ref[2:3, :]
    B_t = bcT_t_ref[0:1, :]
    q_t = bcT_t_ref[1:2, :]
    inv_B_t = 1.0 / B_t
    rep_t = rep_t_ref[...]

    pos_s = pos_s_ref[...]
    B_s = bc_s_ref[:, 0:1]
    q_s = bc_s_ref[:, 1:2]
    inv_B_s = 1.0 / B_s
    rep_s = rep_s_ref[...]

    dx = pos_s[:, 0:1] - px_t + PW_EPS
    dy = pos_s[:, 1:2] - py_t + PW_EPS
    dz = pos_s[:, 2:3] - pz_t + PW_EPS
    d2 = dx * dx + dy * dy + dz * dz                       # work on d^2, no sqrt

    src_idx = c * NC + jax.lax.broadcasted_iota(jnp.int32, (NC, T), 0)
    tgt_idx = i * T + jax.lax.broadcasted_iota(jnp.int32, (NC, T), 1)
    mask = (rep_s == rep_t) & (src_idx != tgt_idx) & (d2 < gb_radius2)

    BB = B_s * B_t
    inv4BB = 0.25 * (inv_B_s * inv_B_t)                    # per-node recips only
    f2 = d2 + BB * jnp.exp(-d2 * inv4BB)
    pair = jnp.where(mask, q_s * q_t * jax.lax.rsqrt(f2), 0.0)
    psum_ref[...] += jnp.sum(pair, axis=0, keepdims=True)  # [1, T]

    @pl.when(c == pl.num_programs(1) - 1)
    def _():
        # TODO(synk): GBNeck_energies source not provided; standard GB polar energy
        # with solute dielectric 1.0 and solvent dielectric 78.5 is used.
        eT_ref[...] = prefac * (q_t * q_t * inv_B_t + psum_ref[...])


def calculate_energies(posT, bcT, rep_row, pos, bc, rep_col, *, tile, chunk, prefac):
    n_pad = pos.shape[0]
    return pl.pallas_call(
        functools.partial(energy_kernel, prefac=prefac,
                          gb_radius2=GB_RADIUS * GB_RADIUS),
        out_shape=jax.ShapeDtypeStruct((1, n_pad), jnp.float32),
        grid=(n_pad // tile, n_pad // chunk),
        in_specs=[
            pl.BlockSpec((3, tile), lambda i, c: (0, i)),
            pl.BlockSpec((2, tile), lambda i, c: (0, i)),
            pl.BlockSpec((1, tile), lambda i, c: (0, i)),
            pl.BlockSpec((chunk, 3), lambda i, c: (c, 0)),
            pl.BlockSpec((chunk, 2), lambda i, c: (c, 0)),
            pl.BlockSpec((chunk, 1), lambda i, c: (c, 0)),
        ],
        out_specs=pl.BlockSpec((1, tile), lambda i, c: (0, i)),
        scratch_shapes=[pltpu.VMEM((1, tile), jnp.float32)],
        compiler_params=_compiler_params(),
    )(posT, bcT, rep_row, pos, bc, rep_col)


# ----------------------------------------------------------------------------
# parameter init (deterministic, synthetic) + forward glue
# ----------------------------------------------------------------------------
def _make_layer(key, f_in, hidden, f_out, scale=0.2):
    ks = jax.random.split(key, 4)
    return dict(
        w1a=scale * jax.random.normal(ks[0], (f_in, hidden), jnp.float32),
        w1b=scale * jax.random.normal(ks[1], (f_in, hidden), jnp.float32),
        w1d=scale * jax.random.normal(ks[2], (hidden, 1), jnp.float32),
        b1=jnp.zeros((1, hidden), jnp.float32),
        w2=scale * jax.random.normal(ks[3], (hidden, f_out), jnp.float32),
        b2=jnp.zeros((1, f_out), jnp.float32),
    )


def init_params(key, num_atoms, hidden=64):
    ks = jax.random.split(key, 5)
    radii = jnp.asarray(DEFAULT_UNIQUE_RADII, jnp.float32)
    ridx = jax.random.randint(ks[0], (num_atoms,), 0, radii.shape[0])
    r = radii[ridx]
    charge = jax.random.uniform(ks[1], (num_atoms,), jnp.float32, -0.5, 0.5)
    or_r = r - OFFSET
    sr = 0.8 * or_r
    gbparams = jnp.stack([charge, or_r, sr], axis=1)        # (q, rho - offset, s*rho)
    return dict(
        gbparams=gbparams,
        layer1=_make_layer(ks[2], 3, hidden, hidden),
        layer2=_make_layer(ks[3], hidden, hidden, hidden),
        layer3=_make_layer(ks[4], hidden, hidden, 2),
        sa_scale=jnp.zeros((1,), jnp.float32),              # nn.Parameter([0.0])
        sa_probe_radius=jnp.zeros((1,), jnp.float32),       # nn.Parameter([0.0])
    )


def forward(params, positions, *, num_atoms, num_reps, fraction=0.5,
            gnn_radius=GNN_RADIUS, solvent_dielectric=78.5, tile=128):
    n = num_atoms * num_reps
    x = jnp.tile(params["gbparams"], (num_reps, 1)).astype(jnp.float32)   # atom_features

    # pad node count to a multiple of the target tile; padded nodes get unique
    # negative rep ids so no pair involving them passes the same-replica mask.
    n_pad = max(_round_up(n, tile), tile)
    pad = n_pad - n
    pad_par = jnp.tile(jnp.array([[0.0, 0.12, 0.096]], jnp.float32), (pad, 1))
    x_pad = jnp.concatenate([x, pad_par], axis=0)                          # [n_pad, 3]
    pos_pad = jnp.concatenate([positions.astype(jnp.float32),
                               jnp.zeros((pad, 3), jnp.float32)], axis=0)

    rep = jnp.concatenate([
        jnp.repeat(jnp.arange(num_reps, dtype=jnp.int32), num_atoms),
        -(jnp.arange(pad, dtype=jnp.int32) + 1)])
    rep_col = rep[:, None]                                                 # [n_pad, 1]
    rep_row = rep[None, :]                                                 # [1, n_pad]
    posT = pos_pad.T                                                       # [3, n_pad]
    parT = x_pad.T                                                         # [3, n_pad]

    chunk_pair = _pick_chunk(n_pad, 512)
    chunk_msg = _pick_chunk(n_pad, 128)

    # TODO(synk): RadiusGraph max_num_neighbors=32 cap is not reproduced; full
    # radius graphs (10 nm GB / 0.4 nm GNN, within-replica, no self loops) are used.
    bcT = aggregate_information(posT, parT, rep_row, pos_pad, x_pad, rep_col,
                                tile=tile, chunk=chunk_pair)               # [2, n_pad]
    Bc = bcT.T                                                             # [n_pad, 2]

    Bcn = jnp.concatenate([Bc, x_pad[:, 1:2]], axis=1)                     # [n_pad, 3]
    r2 = gnn_radius * gnn_radius
    Bcn = _interaction(Bcn, pos_pad, posT, rep_col, rep_row, params["layer1"],
                       tile=tile, chunk=chunk_msg, radius2=r2)
    Bcn = jax.nn.silu(Bcn)
    Bcn = _interaction(Bcn, pos_pad, posT, rep_col, rep_row, params["layer2"],
                       tile=tile, chunk=chunk_msg, radius2=r2)
    Bcn = jax.nn.silu(Bcn)
    Bcn = _interaction(Bcn, pos_pad, posT, rep_col, rep_row, params["layer3"],
                       tile=tile, chunk=chunk_msg, radius2=r2)             # [n_pad, 2]

    c_scale = Bcn[:, 0:1]
    sa_scale = Bcn[:, 1:2]
    radius = x_pad[:, 1:2] + OFFSET
    sasa = (1.0 - 2.0 * jax.nn.sigmoid(sa_scale)) * (radius + params["sa_probe_radius"]) ** 2
    sa_energies = sasa * params["sa_scale"]                                # [n_pad, 1]

    born_scaled = Bc[:, 0:1] * (fraction + jax.nn.sigmoid(c_scale) * (1.0 - fraction) * 2.0)
    Bc2 = jnp.concatenate([born_scaled, Bc[:, 1:2]], axis=1)               # [n_pad, 2]

    prefac = -0.5 * KE * (1.0 - 1.0 / solvent_dielectric)
    eT = calculate_energies(posT, Bc2.T, rep_row, pos_pad, Bc2, rep_col,
                            tile=tile, chunk=chunk_pair, prefac=prefac)    # [1, n_pad]

    energies = eT[0, :n] + sa_energies[:n, 0]
    # TODO(synk): torch forward also returns forces = -grad(sum(E), pos); the Pallas
    # kernels have no custom VJP here, so only the summed-energy forward is returned.
    return jnp.sum(energies)


# ----------------------------------------------------------------------------
if __name__ == "__main__":
    key = jax.random.PRNGKey(0)
    k_par, k_pos = jax.random.split(key)

    num_atoms = 10        # atoms per replica (len(parameters))
    num_reps = 2          # replicas (batch); edges only within each replica
    hidden = 64           # GNN3_scale_64 -> hidden = 64

    params = init_params(k_par, num_atoms, hidden=hidden)
    positions = jax.random.uniform(k_pos, (num_reps * num_atoms, 3), jnp.float32,
                                   minval=0.0, maxval=0.8)   # nm

    total_energy = forward(params, positions,
                           num_atoms=num_atoms, num_reps=num_reps)
    jax.block_until_ready(total_energy)
    print("KERNEL_OK")
</pallas_src>

<mosaic_0001>
module attributes {stable_mosaic.version = 11 : i64} {
  func.func @born_kernel(%arg0: i32, %arg1: i32, %arg2: memref<3x128xf32, #tpu.memory_space<vmem>>, %arg3: memref<3x128xf32, #tpu.memory_space<vmem>>, %arg4: memref<1x128xi32, #tpu.memory_space<vmem>>, %arg5: memref<128x3xf32, #tpu.memory_space<vmem>>, %arg6: memref<128x3xf32, #tpu.memory_space<vmem>>, %arg7: memref<128x1xi32, #tpu.memory_space<vmem>>, %arg8: memref<2x128xf32, #tpu.memory_space<vmem>>, %arg9: memref<1x128xf32, #tpu.memory_space<vmem>>) attributes {dimension_semantics = [#tpu.dimension_semantics<parallel>, #tpu.dimension_semantics<arbitrary>], iteration_bounds = array<i64: 1, 1>, scalar_prefetch = 0 : i64, scratch_operands = 1 : i64, tpu.core_type = #tpu.core_type<tc>, window_params = [{transform_indices = @transform_0, window_bounds = array<i64: 3, 128>}, {transform_indices = @transform_1, window_bounds = array<i64: 3, 128>}, {transform_indices = @transform_2, window_bounds = array<i64: 1, 128>}, {transform_indices = @transform_3, window_bounds = array<i64: 128, 3>}, {transform_indices = @transform_4, window_bounds = array<i64: 128, 3>}, {transform_indices = @transform_5, window_bounds = array<i64: 128, 1>}, {transform_indices = @transform_6, window_bounds = array<i64: 2, 128>}]} {
    %c0_i32 = arith.constant 0 : i32
    %0 = arith.cmpi eq, %arg1, %c0_i32 : i32
    %1 = arith.extui %0 : i1 to i32
    %c0_i32_0 = arith.constant 0 : i32
    %2 = arith.cmpi ne, %1, %c0_i32_0 : i32
    scf.if %2 {
      %cst_37 = arith.constant 0.000000e+00 : f32
      %114 = vector.broadcast %cst_37 : f32 to vector<1x128xf32>
      %c0_38 = arith.constant 0 : index
      %c0_39 = arith.constant 0 : index
      %115 = vector.load %arg9[%c0_38, %c0_39] : memref<1x128xf32, #tpu.memory_space<vmem>>, vector<1x128xf32>
      tpu.vector_store %arg9[%c0_38, %c0_39], %114 {strides = array<i32>} : memref<1x128xf32, #tpu.memory_space<vmem>>, vector<1x128xf32>,
    } else {
    }
    %c0 = arith.constant 0 : index
    %c0_1 = arith.constant 0 : index
    %3 = vector.load %arg2[%c0, %c0_1] : memref<3x128xf32, #tpu.memory_space<vmem>>, vector<1x128xf32>
    %c1 = arith.constant 1 : index
    %c0_2 = arith.constant 0 : index
    %4 = vector.load %arg2[%c1, %c0_2] : memref<3x128xf32, #tpu.memory_space<vmem>>, vector<1x128xf32>
    %c2 = arith.constant 2 : index
    %c0_3 = arith.constant 0 : index
    %5 = vector.load %arg2[%c2, %c0_3] : memref<3x128xf32, #tpu.memory_space<vmem>>, vector<1x128xf32>
    %c0_4 = arith.constant 0 : index
    %c0_5 = arith.constant 0 : index
    %6 = vector.load %arg3[%c0_4, %c0_5] : memref<3x128xf32, #tpu.memory_space<vmem>>, vector<1x128xf32>
    %c1_6 = arith.constant 1 : index
    %c0_7 = arith.constant 0 : index
    %7 = vector.load %arg3[%c1_6, %c0_7] : memref<3x128xf32, #tpu.memory_space<vmem>>, vector<1x128xf32>
    %cst = arith.constant 1.000000e+00 : f32
    %8 = vector.broadcast %cst : f32 to vector<1x128xf32>
    %9 = arith.divf %8, %7 : vector<1x128xf32>
    %c0_8 = arith.constant 0 : index
    %c0_9 = arith.constant 0 : index
    %10 = vector.load %arg4[%c0_8, %c0_9] : memref<1x128xi32, #tpu.memory_space<vmem>>, vector<1x128xi32>
    %c0_10 = arith.constant 0 : index
    %c0_11 = arith.constant 0 : index
    %11 = vector.load %arg5[%c0_10, %c0_11] : memref<128x3xf32, #tpu.memory_space<vmem>>, vector<128x3xf32>
    %c0_12 = arith.constant 0 : index
    %c2_13 = arith.constant 2 : index
    %12 = vector.load %arg6[%c0_12, %c2_13] : memref<128x3xf32, #tpu.memory_space<vmem>>, vector<128x1xf32>
    %c0_14 = arith.constant 0 : index
    %c0_15 = arith.constant 0 : index
    %13 = vector.load %arg7[%c0_14, %c0_15] : memref<128x1xi32, #tpu.memory_space<vmem>>, vector<128x1xi32>
    %14 = vector.extract_strided_slice %11 {offsets = [0, 0], sizes = [128, 1], strides = [1, 1]} : vector<128x3xf32> to vector<128x1xf32>
    %15 = vector.broadcast %14 : vector<128x1xf32> to vector<128x128xf32>
    %16 = vector.broadcast %3 : vector<1x128xf32> to vector<128x128xf32>
    %17 = arith.subf %15, %16 : vector<128x128xf32>
    %cst_16 = arith.constant 9.99999997E-7 : f32
    %18 = vector.broadcast %cst_16 : f32 to vector<128x128xf32>
    %19 = arith.addf %17, %18 : vector<128x128xf32>
    %20 = vector.extract_strided_slice %11 {offsets = [0, 1], sizes = [128, 1], strides = [1, 1]} : vector<128x3xf32> to vector<128x1xf32>
    %21 = vector.broadcast %20 : vector<128x1xf32> to vector<128x128xf32>
    %22 = vector.broadcast %4 : vector<1x128xf32> to vector<128x128xf32>
    %23 = arith.subf %21, %22 : vector<128x128xf32>
    %cst_17 = arith.constant 9.99999997E-7 : f32
    %24 = vector.broadcast %cst_17 : f32 to vector<128x128xf32>
    %25 = arith.addf %23, %24 : vector<128x128xf32>
    %26 = vector.extract_strided_slice %11 {offsets = [0, 2], sizes = [128, 1], strides = [1, 1]} : vector<128x3xf32> to vector<128x1xf32>
    %27 = vector.broadcast %26 : vector<128x1xf32> to vector<128x128xf32>
    %28 = vector.broadcast %5 : vector<1x128xf32> to vector<128x128xf32>
    %29 = arith.subf %27, %28 : vector<128x128xf32>
    %cst_18 = arith.constant 9.99999997E-7 : f32
    %30 = vector.broadcast %cst_18 : f32 to vector<128x128xf32>
    %31 = arith.addf %29, %30 : vector<128x128xf32>
    %32 = arith.mulf %19, %19 : vector<128x128xf32>
    %33 = arith.mulf %25, %25 : vector<128x128xf32>
    %34 = arith.addf %32, %33 : vector<128x128xf32>
    %35 = arith.mulf %31, %31 : vector<128x128xf32>
    %36 = arith.addf %34, %35 : vector<128x128xf32>
    %c128_i32 = arith.constant 128 : i32
    %37 = arith.muli %arg1, %c128_i32 : i32
    %38 = tpu.iota {dimensions = array<i32: 0>} : vector<128x128xi32>
    %39 = vector.broadcast %37 : i32 to vector<128x128xi32>
    %40 = arith.addi %39, %38 : vector<128x128xi32>
    %c128_i32_19 = arith.constant 128 : i32
    %41 = arith.muli %arg0, %c128_i32_19 : i32
    %42 = tpu.iota {dimensions = array<i32: 1>} : vector<128x128xi32>
    %43 = vector.broadcast %41 : i32 to vector<128x128xi32>
    %44 = arith.addi %43, %42 : vector<128x128xi32>
    %45 = vector.broadcast %13 : vector<128x1xi32> to vector<128x128xi32>
    %46 = vector.broadcast %10 : vector<1x128xi32> to vector<128x128xi32>
    %47 = arith.cmpi eq, %45, %46 : vector<128x128xi32>
    %48 = arith.cmpi ne, %40, %44 : vector<128x128xi32>
    %49 = arith.andi %47, %48 : vector<128x128xi1>
    %cst_20 = arith.constant 1.000000e+02 : f32
    %50 = vector.broadcast %cst_20 : f32 to vector<128x128xf32>
    %51 = arith.cmpf olt, %36, %50 : vector<128x128xf32>
    %52 = arith.andi %49, %51 : vector<128x128xi1>
    %53 = math.sqrt %36 : vector<128x128xf32>
    %cst_21 = arith.constant 1.000000e+00 : f32
    %54 = vector.broadcast %cst_21 : f32 to vector<128x128xf32>
    %55 = arith.select %52, %53, %54 : vector<128x128xi1>, vector<128x128xf32>
    %cst_22 = arith.constant 1.000000e+00 : f32
    %56 = vector.broadcast %cst_22 : f32 to vector<128x128xf32>
    %57 = arith.divf %56, %55 : vector<128x128xf32>
    %58 = vector.broadcast %12 : vector<128x1xf32> to vector<128x128xf32>
    %59 = arith.addf %55, %58 : vector<128x128xf32>
    %60 = vector.broadcast %12 : vector<128x1xf32> to vector<128x128xf32>
    %61 = arith.subf %55, %60 : vector<128x128xf32>
    %62 = math.absf %61 : vector<128x128xf32>
    %63 = vector.broadcast %7 : vector<1x128xf32> to vector<128x128xf32>
    %64 = arith.maximumf %62, %63 : vector<128x128xf32>
    %65 = arith.mulf %64, %59 : vector<128x128xf32>
    %cst_23 = arith.constant 1.000000e+00 : f32
    %66 = vector.broadcast %cst_23 : f32 to vector<128x128xf32>
    %67 = arith.divf %66, %65 : vector<128x128xf32>
    %68 = arith.mulf %59, %67 : vector<128x128xf32>
    %69 = arith.mulf %64, %67 : vector<128x128xf32>
    %70 = arith.subf %68, %69 : vector<128x128xf32>
    %71 = arith.mulf %12, %12 : vector<128x1xf32>
    %72 = vector.broadcast %71 : vector<128x1xf32> to vector<128x128xf32>
    %73 = arith.mulf %72, %57 : vector<128x128xf32>
    %74 = arith.subf %55, %73 : vector<128x128xf32>
    %cst_24 = arith.constant 2.500000e-01 : f32
    %75 = vector.broadcast %cst_24 : f32 to vector<128x128xf32>
    %76 = arith.mulf %75, %74 : vector<128x128xf32>
    %77 = arith.mulf %69, %69 : vector<128x128xf32>
    %78 = arith.mulf %68, %68 : vector<128x128xf32>
    %79 = arith.subf %77, %78 : vector<128x128xf32>
    %80 = arith.mulf %76, %79 : vector<128x128xf32>
    %81 = arith.addf %70, %80 : vector<128x128xf32>
    %cst_25 = arith.constant 5.000000e-01 : f32
    %82 = vector.broadcast %cst_25 : f32 to vector<128x128xf32>
    %83 = arith.mulf %82, %57 : vector<128x128xf32>
    %84 = arith.mulf %64, %69 : vector<128x128xf32>
    %85 = math.log %84 : vector<128x128xf32>
    %86 = arith.mulf %83, %85 : vector<128x128xf32>
    %87 = arith.addf %81, %86 : vector<128x128xf32>
    %cst_26 = arith.constant 5.000000e-01 : f32
    %88 = vector.broadcast %cst_26 : f32 to vector<128x128xf32>
    %89 = arith.mulf %88, %87 : vector<128x128xf32>
    %90 = vector.broadcast %12 : vector<128x1xf32> to vector<128x128xf32>
    %91 = arith.subf %90, %55 : vector<128x128xf32>
    %92 = vector.broadcast %7 : vector<1x128xf32> to vector<128x128xf32>
    %93 = arith.cmpf olt, %92, %91 : vector<128x128xf32>
    %94 = vector.broadcast %9 : vector<1x128xf32> to vector<128x128xf32>
    %95 = arith.subf %94, %68 : vector<128x128xf32>
    %cst_27 = arith.constant 2.000000e+00 : f32
    %96 = vector.broadcast %cst_27 : f32 to vector<128x128xf32>
    %97 = arith.mulf %96, %95 : vector<128x128xf32>
    %cst_28 = arith.constant 0.000000e+00 : f32
    %98 = vector.broadcast %cst_28 : f32 to vector<128x128xf32>
    %99 = arith.select %93, %97, %98 : vector<128x128xi1>, vector<128x128xf32>
    %100 = arith.addf %89, %99 : vector<128x128xf32>
    %101 = vector.broadcast %7 : vector<1x128xf32> to vector<128x128xf32>
    %102 = arith.cmpf olt, %101, %59 : vector<128x128xf32>
    %103 = arith.andi %52, %102 : vector<128x128xi1>
    %cst_29 = arith.constant 0.000000e+00 : f32
    %104 = vector.broadcast %cst_29 : f32 to vector<128x128xf32>
    %105 = arith.select %103, %100, %104 : vector<128x128xi1>, vector<128x128xf32>
    %c0_30 = arith.constant 0 : index
    %c0_31 = arith.constant 0 : index
    %106 = vector.load %arg9[%c0_30, %c0_31] : memref<1x128xf32, #tpu.memory_space<vmem>>, vector<1x128xf32>
    %cst_32 = arith.constant dense<0.000000e+00> : vector<128xf32>
    %107 = vector.multi_reduction <add>, %105, %cst_32 [0] : vector<128x128xf32> to vector<128xf32>
    %108 = vector.shape_cast %107 : vector<128xf32> to vector<1x128xf32>
    %109 = arith.addf %106, %108 : vector<1x128xf32>
    %c0_33 = arith.constant 0 : index
    %c0_34 = arith.constant 0 : index
    %110 = vector.load %arg9[%c0_33, %c0_34] : memref<1x128xf32, #tpu.memory_space<vmem>>, vector<1x128xf32>
    tpu.vector_store %arg9[%c0_33, %c0_34], %109 {strides = array<i32>} : memref<1x128xf32, #tpu.memory_space<vmem>>, vector<1x128xf32>,
    %c0_i32_35 = arith.constant 0 : i32
    %111 = arith.cmpi eq, %arg1, %c0_i32_35 : i32
    %112 = arith.extui %111 : i1 to i32
    %c0_i32_36 = arith.constant 0 : i32
    %113 = arith.cmpi ne, %112, %c0_i32_36 : i32
    scf.if %113 {
      %c0_37 = arith.constant 0 : index
      %c0_38 = arith.constant 0 : index
      %114 = vector.load %arg9[%c0_37, %c0_38] : memref<1x128xf32, #tpu.memory_space<vmem>>, vector<1x128xf32>
      %115 = arith.mulf %114, %7 : vector<1x128xf32>
      %cst_39 = arith.constant 1.000000e+00 : f32
      %116 = vector.broadcast %cst_39 : f32 to vector<1x128xf32>
      %117 = arith.mulf %116, %115 : vector<1x128xf32>
      %cst_40 = arith.constant 8.000000e-01 : f32
      %118 = vector.broadcast %cst_40 : f32 to vector<1x128xf32>
      %119 = arith.mulf %118, %115 : vector<1x128xf32>
      %120 = arith.mulf %119, %115 : vector<1x128xf32>
      %121 = arith.subf %117, %120 : vector<1x128xf32>
      %cst_41 = arith.constant 4.850000e+00 : f32
      %122 = vector.broadcast %cst_41 : f32 to vector<1x128xf32>
      %123 = arith.mulf %122, %115 : vector<1x128xf32>
      %124 = arith.mulf %123, %115 : vector<1x128xf32>
      %125 = arith.mulf %124, %115 : vector<1x128xf32>
      %126 = arith.addf %121, %125 : vector<1x128xf32>
      %127 = math.tanh %126 : vector<1x128xf32>
      %cst_42 = arith.constant 1.951410e-02 : f32
      %128 = vector.broadcast %cst_42 : f32 to vector<1x128xf32>
      %129 = arith.addf %7, %128 : vector<1x128xf32>
      %130 = arith.divf %127, %129 : vector<1x128xf32>
      %131 = arith.subf %9, %130 : vector<1x128xf32>
      %cst_43 = arith.constant 1.000000e+00 : f32
      %132 = vector.broadcast %cst_43 : f32 to vector<1x128xf32>
      %133 = arith.divf %132, %131 : vector<1x128xf32>
      %c0_44 = arith.constant 0 : index
      %c0_45 = arith.constant 0 : index
      %134 = vector.load %arg8[%c0_44, %c0_45] : memref<2x128xf32, #tpu.memory_space<vmem>>, vector<1x128xf32>
      tpu.vector_store %arg8[%c0_44, %c0_45], %133 {strides = array<i32>} : memref<2x128xf32, #tpu.memory_space<vmem>>, vector<1x128xf32>,
      %c1_46 = arith.constant 1 : index
      %c0_47 = arith.constant 0 : index
      %135 = vector.load %arg8[%c1_46, %c0_47] : memref<2x128xf32, #tpu.memory_space<vmem>>, vector<1x128xf32>
      tpu.vector_store %arg8[%c1_46, %c0_47], %6 {strides = array<i32>} : memref<2x128xf32, #tpu.memory_space<vmem>>, vector<1x128xf32>,
    } else {
    }
    return
  }
  func.func @transform_0(%arg0: i32, %arg1: i32) -> (i32, i32) {
    %c0_i32 = arith.constant 0 : i32
    %c0_i32_0 = arith.constant 0 : i32
    return %c0_i32, %arg0 : i32, i32
  }
  func.func @transform_1(%arg0: i32, %arg1: i32) -> (i32, i32) {
    %c0_i32 = arith.constant 0 : i32
    %c0_i32_0 = arith.constant 0 : i32
    return %c0_i32, %arg0 : i32, i32
  }
  func.func @transform_2(%arg0: i32, %arg1: i32) -> (i32, i32) {
    %c0_i32 = arith.constant 0 : i32
    %c0_i32_0 = arith.constant 0 : i32
    return %c0_i32, %arg0 : i32, i32
  }
  func.func @transform_3(%arg0: i32, %arg1: i32) -> (i32, i32) {
    %c0_i32 = arith.constant 0 : i32
    %c0_i32_0 = arith.constant 0 : i32
    return %arg1, %c0_i32 : i32, i32
  }
  func.func @transform_4(%arg0: i32, %arg1: i32) -> (i32, i32) {
    %c0_i32 = arith.constant 0 : i32
    %c0_i32_0 = arith.constant 0 : i32
    return %arg1, %c0_i32 : i32, i32
  }
  func.func @transform_5(%arg0: i32, %arg1: i32) -> (i32, i32) {
    %c0_i32 = arith.constant 0 : i32
    %c0_i32_0 = arith.constant 0 : i32
    return %arg1, %c0_i32 : i32, i32
  }
  func.func @transform_6(%arg0: i32, %arg1: i32) -> (i32, i32) {
    %c0_i32 = arith.constant 0 : i32
    %c0_i32_0 = arith.constant 0 : i32
    return %c0_i32, %arg0 : i32, i32
  }
}

</mosaic_0001>

<llo_original>
// kernel: tpu_custom_call.1
$region0: #{tpu_custom_call.1}
  #allocation0 [shape = 'u32[]', space=smem, size = 0x4, offset = 0x4, fixed_abs, tag = 'smem constant byte address 0x4 - core index']
  #allocation1 [shape = 'u32[144,128]{1,0:T(1,128)}', space=vmem, size = 0x12000, scoped, tag = 'internal scratch']
  #allocation2 [shape = 'f32[1,128]{1,0:T(1,128)}', space=vmem, size = 0x200, scoped, tag = 'scratch operand']
  %s0 = inlined_call_operand.vmem [shape: f32[3,128], index: 0, kind: input, shape index: {}]
  %s1 = inlined_call_operand.vmem [shape: f32[3,128], index: 1, kind: input, shape index: {}]
  %s2 = inlined_call_operand.vmem [shape: s32[1,128], index: 2, kind: input, shape index: {}]
  %s3 = inlined_call_operand.vmem [shape: f32[128,3], index: 3, kind: input, shape index: {}]
  %s4 = inlined_call_operand.vmem [shape: f32[128,3], index: 4, kind: input, shape index: {}]
  %s5 = inlined_call_operand.vmem [shape: s32[128,1], index: 5, kind: input, shape index: {}]
  %s6 = inlined_call_operand.hbm [shape: f32[2,128], index: 6, kind: output, shape index: {}]
  %s7 = sld [smem:[#allocation0]]
  $region42: #{tpu_custom_call.1} parent=0
    _
  %s9 = ssub.s32 1, %s7
  %s10 = scalar_select 0, %s9, %s7
  $region1: #{tpu_custom_call.1} parent=0
    #allocation3 [shape = 'u8[1024]{0}', space=vmem, size = 0x400, scoped, tag = 'output window, operand 0, single buffered']
    #allocation4 [shape = 's32[1]{0}', space=sflag, size = 0x4, scoped, tag = 'scoped memory for tpu_custom_call.1']
    %11 = vsyncpa [#allocation4], 0
    // Predicated region
    $region2: #{tpu_custom_call.1} parent=1 // pred_check
      _
    $region3: #{tpu_custom_call.1} parent=1 // pred_check_branch
      %13 = sbr.rel (0) target = $region5
    $region4: #{tpu_custom_call.1} parent=1 // pred_region
      _
    $region5: #{tpu_custom_call.1} parent=1 // pred_fallthru
      _
    // Predicated region
    $region6: #{tpu_custom_call.1} parent=1 // pred_check
      _
    $region7: #{tpu_custom_call.1} parent=1 // pred_check_branch
      %15 = sbr.rel (0) target = $region9
    $region8: #{tpu_custom_call.1} parent=1 // pred_region
      _
    $region9: #{tpu_custom_call.1} parent=1 // pred_fallthru
      _
    // Predicated region
    $region10: #{tpu_custom_call.1} parent=1 // pred_check
      _
    $region11: #{tpu_custom_call.1} parent=1 // pred_check_branch
      %17 = sbr.rel (0) target = $region13
    $region12: #{tpu_custom_call.1} parent=1 // pred_region
      _
    $region13: #{tpu_custom_call.1} parent=1 // pred_fallthru
      _
    // Predicated region
    $region14: #{tpu_custom_call.1} parent=1 // pred_check
      _
    $region15: #{tpu_custom_call.1} parent=1 // pred_check_branch
      %19 = sbr.rel (0) target = $region17
    $region16: #{tpu_custom_call.1} parent=1 // pred_region
      _
    $region17: #{tpu_custom_call.1} parent=1 // pred_fallthru
      _
    // Predicated region
    $region18: #{tpu_custom_call.1} parent=1 // pred_check
      _
    $region19: #{tpu_custom_call.1} parent=1 // pred_check_branch
      %21 = sbr.rel (0) target = $region21
    $region20: #{tpu_custom_call.1} parent=1 // pred_region
      _
    $region21: #{tpu_custom_call.1} parent=1 // pred_fallthru
      _
    // Predicated region
    $region22: #{tpu_custom_call.1} parent=1 // pred_check
      _
    $region23: #{tpu_custom_call.1} parent=1 // pred_check_branch
      %23 = sbr.rel (0) target = $region25
    $region24: #{tpu_custom_call.1} parent=1 // pred_region
      _
    $region25: #{tpu_custom_call.1} parent=1 // pred_fallthru
      _
    %p24 = scmp.eq.s32.totalorder 0, 0
    // Predicated region
    $region26: #{tpu_custom_call.1} parent=1 // pred_check
      %p25 = pneg %p24
    $region27: #{tpu_custom_call.1} parent=1 // pred_check_branch
      %27 = sbr.rel (%p25) target = $region29
    $region28: #{tpu_custom_call.1} parent=1 // pred_region
      %28 = vst [vmem:[#allocation2] sm:$0x1] 0.0
    $region29: #{tpu_custom_call.1} parent=1 // pred_fallthru
      _
    %v29 = vld [vmem:[%s0] sm:$0x1]
    %v30 = vld [vmem:[%s0 + $0x1] sm:$0x1]
    %v31 = vld [vmem:[%s0 + $0x2] sm:$0x1]
    %v32 = vld [vmem:[%s1] sm:$0x1]
    %v33 = vld [vmem:[%s1 + $0x1] sm:$0x1]
    %v34 = vrcp.pop %v33
    %v35 = vmul.f32 1.0, %v34
    %v36 = vld [vmem:[%s2] sm:$0x1]
    %v37 = vld [vmem:[%s3] sm:$0xff]
    %v38 = vld [vmem:[%s3 + $0x8] sm:$0xff]
    %v39 = vld [vmem:[%s3 + $0x10] sm:$0xff]
    %v40 = vld [vmem:[%s3 + $0x18] sm:$0xff]
    %v41 = vld [vmem:[%s3 + $0x20] sm:$0xff]
    %v42 = vld [vmem:[%s3 + $0x28] sm:$0xff]
    %v43 = vld [vmem:[%s3 + $0x30] sm:$0xff]
    %v44 = vld [vmem:[%s3 + $0x38] sm:$0xff]
    %v45 = vld [vmem:[%s3 + $0x40] sm:$0xff]
    %v46 = vld [vmem:[%s3 + $0x48] sm:$0xff]
    %v47 = vld [vmem:[%s3 + $0x50] sm:$0xff]
    %v48 = vld [vmem:[%s3 + $0x58] sm:$0xff]
    %v49 = vld [vmem:[%s3 + $0x60] sm:$0xff]
    %v50 = vld [vmem:[%s3 + $0x68] sm:$0xff]
    %v51 = vld [vmem:[%s3 + $0x70] sm:$0xff]
    %v52 = vld [vmem:[%s3 + $0x78] sm:$0xff]
    %v53 = vld [vmem:[%s4] sm:$0xff]
    %v54 = vld [vmem:[%s4 + $0x8] sm:$0xff]
    %v55 = vld [vmem:[%s4 + $0x10] sm:$0xff]
    %v56 = vld [vmem:[%s4 + $0x18] sm:$0xff]
    %v57 = vld [vmem:[%s4 + $0x20] sm:$0xff]
    %v58 = vld [vmem:[%s4 + $0x28] sm:$0xff]
    %v59 = vld [vmem:[%s4 + $0x30] sm:$0xff]
    %v60 = vld [vmem:[%s4 + $0x38] sm:$0xff]
    %v61 = vld [vmem:[%s4 + $0x40] sm:$0xff]
    %v62 = vld [vmem:[%s4 + $0x48] sm:$0xff]
    %v63 = vld [vmem:[%s4 + $0x50] sm:$0xff]
    %v64 = vld [vmem:[%s4 + $0x58] sm:$0xff]
    %v65 = vld [vmem:[%s4 + $0x60] sm:$0xff]
    %v66 = vld [vmem:[%s4 + $0x68] sm:$0xff]
    %v67 = vld [vmem:[%s4 + $0x70] sm:$0xff]
    %v68 = vld [vmem:[%s4 + $0x78] sm:$0xff]
    %v69 = vld [vmem:[%s5] sm:$0xff]
    %v70 = vld [vmem:[%s5 + $0x8] sm:$0xff]
    %v71 = vld [vmem:[%s5 + $0x10] sm:$0xff]
    %v72 = vld [vmem:[%s5 + $0x18] sm:$0xff]
    %v73 = vld [vmem:[%s5 + $0x20] sm:$0xff]
    %v74 = vld [vmem:[%s5 + $0x28] sm:$0xff]
    %v75 = vld [vmem:[%s5 + $0x30] sm:$0xff]
    %v76 = vld [vmem:[%s5 + $0x38] sm:$0xff]
    %v77 = vld [vmem:[%s5 + $0x40] sm:$0xff]
    %v78 = vld [vmem:[%s5 + $0x48] sm:$0xff]
    %v79 = vld [vmem:[%s5 + $0x50] sm:$0xff]
    %v80 = vld [vmem:[%s5 + $0x58] sm:$0xff]
    %v81 = vld [vmem:[%s5 + $0x60] sm:$0xff]
    %v82 = vld [vmem:[%s5 + $0x68] sm:$0xff]
    %v83 = vld [vmem:[%s5 + $0x70] sm:$0xff]
    %v84 = vld [vmem:[%s5 + $0x78] sm:$0xff]
    %86 = vset.pattern.permute.xlu0 0
    %87 = vperm.xlu0 %86, %v37
    %v88 = vpop.permute.xlu0 %87
    %91 = vset.pattern.permute.xlu0 0
    %92 = vperm.xlu0 %91, %v38
    %v93 = vpop.permute.xlu0 %92
    %96 = vset.pattern.permute.xlu0 0
    %97 = vperm.xlu0 %96, %v39
    %v98 = vpop.permute.xlu0 %97
    %101 = vset.pattern.permute.xlu0 0
    %102 = vperm.xlu0 %101, %v40
    %v103 = vpop.permute.xlu0 %102
    %106 = vset.pattern.permute.xlu0 0
    %107 = vperm.xlu0 %106, %v41
    %v108 = vpop.permute.xlu0 %107
    %111 = vset.pattern.permute.xlu0 0
    %112 = vperm.xlu0 %111, %v42
    %v113 = vpop.permute.xlu0 %112
    %116 = vset.pattern.permute.xlu0 0
    %117 = vperm.xlu0 %116, %v43
    %v118 = vpop.permute.xlu0 %117
    %121 = vset.pattern.permute.xlu0 0
    %122 = vperm.xlu0 %121, %v44
    %v123 = vpop.permute.xlu0 %122
    %126 = vset.pattern.permute.xlu0 0
    %127 = vperm.xlu0 %126, %v45
    %v128 = vpop.permute.xlu0 %127
    %131 = vset.pattern.permute.xlu0 0
    %132 = vperm.xlu0 %131, %v46
    %v133 = vpop.permute.xlu0 %132
    %136 = vset.pattern.permute.xlu0 0
    %137 = vperm.xlu0 %136, %v47
    %v138 = vpop.permute.xlu0 %137
    %141 = vset.pattern.permute.xlu0 0
    %142 = vperm.xlu0 %141, %v48
    %v143 = vpop.permute.xlu0 %142
    %146 = vset.pattern.permute.xlu0 0
    %147 = vperm.xlu0 %146, %v49
    %v148 = vpop.permute.xlu0 %147
    %151 = vset.pattern.permute.xlu0 0
    %152 = vperm.xlu0 %151, %v50
    %v153 = vpop.permute.xlu0 %152
    %156 = vset.pattern.permute.xlu0 0
    %157 = vperm.xlu0 %156, %v51
    %v158 = vpop.permute.xlu0 %157
    %161 = vset.pattern.permute.xlu0 0
    %162 = vperm.xlu0 %161, %v52
    %v163 = vpop.permute.xlu0 %162
    %v165 = vlaneseq
    %v166 = vshrl.u32 %v165, 7
    %v167 = vsub.s32 0, %v166
    %v168 = vrot.slane %v29, %v167
    %v169 = vsub.f32 %v88, %v168
    %v170 = vsub.f32 %v93, %v168
    %v171 = vsub.f32 %v98, %v168
    %v172 = vsub.f32 %v103, %v168
    %v173 = vsub.f32 %v108, %v168
    %v174 = vsub.f32 %v113, %v168
    %v175 = vsub.f32 %v118, %v168
    %v176 = vsub.f32 %v123, %v168
    %v177 = vsub.f32 %v128, %v168
    %v178 = vsub.f32 %v133, %v168
    %v179 = vsub.f32 %v138, %v168
    %v180 = vsub.f32 %v143, %v168
    %v181 = vsub.f32 %v148, %v168
    %v182 = vsub.f32 %v153, %v168
    %v183 = vsub.f32 %v158, %v168
    %v184 = vsub.f32 %v163, %v168
    %v185 = vadd.f32 %v169, 1e-06
    %v186 = vadd.f32 %v170, 1e-06
    %v187 = vadd.f32 %v171, 1e-06
    %v188 = vadd.f32 %v172, 1e-06
    %v189 = vadd.f32 %v173, 1e-06
    %v190 = vadd.f32 %v174, 1e-06
    %v191 = vadd.f32 %v175, 1e-06
    %v192 = vadd.f32 %v176, 1e-06
    %v193 = vadd.f32 %v177, 1e-06
    %v194 = vadd.f32 %v178, 1e-06
    %v195 = vadd.f32 %v179, 1e-06
    %v196 = vadd.f32 %v180, 1e-06
    %v197 = vadd.f32 %v181, 1e-06
    %v198 = vadd.f32 %v182, 1e-06
    %v199 = vadd.f32 %v183, 1e-06
    %v200 = vadd.f32 %v184, 1e-06
    %201 = vset.pattern.permute.xlu0 1
    %202 = vperm.xlu0 %201, %v37
    %v203 = vpop.permute.xlu0 %202
    %205 = vset.pattern.permute.xlu0 1
    %206 = vperm.xlu0 %205, %v38
    %v207 = vpop.permute.xlu0 %206
    %209 = vset.pattern.permute.xlu0 1
    %210 = vperm.xlu0 %209, %v39
    %v211 = vpop.permute.xlu0 %210
    %213 = vset.pattern.permute.xlu0 1
    %214 = vperm.xlu0 %213, %v40
    %v215 = vpop.permute.xlu0 %214
    %217 = vset.pattern.permute.xlu0 1
    %218 = vperm.xlu0 %217, %v41
    %v219 = vpop.permute.xlu0 %218
    %221 = vset.pattern.permute.xlu0 1
    %222 = vperm.xlu0 %221, %v42
    %v223 = vpop.permute.xlu0 %222
    %225 = vset.pattern.permute.xlu0 1
    %226 = vperm.xlu0 %225, %v43
    %v227 = vpop.permute.xlu0 %226
    %229 = vset.pattern.permute.xlu0 1
    %230 = vperm.xlu0 %229, %v44
    %v231 = vpop.permute.xlu0 %230
    %233 = vset.pattern.permute.xlu0 1
    %234 = vperm.xlu0 %233, %v45
    %v235 = vpop.permute.xlu0 %234
    %237 = vset.pattern.permute.xlu0 1
    %238 = vperm.xlu0 %237, %v46
    %v239 = vpop.permute.xlu0 %238
    %241 = vset.pattern.permute.xlu0 1
    %242 = vperm.xlu0 %241, %v47
    %v243 = vpop.permute.xlu0 %242
    %245 = vset.pattern.permute.xlu0 1
    %246 = vperm.xlu0 %245, %v48
    %v247 = vpop.permute.xlu0 %246
    %249 = vset.pattern.permute.xlu0 1
    %250 = vperm.xlu0 %249, %v49
    %v251 = vpop.permute.xlu0 %250
    %253 = vset.pattern.permute.xlu0 1
    %254 = vperm.xlu0 %253, %v50
    %v255 = vpop.permute.xlu0 %254
    %257 = vset.pattern.permute.xlu0 1
    %258 = vperm.xlu0 %257, %v51
    %v259 = vpop.permute.xlu0 %258
    %261 = vset.pattern.permute.xlu0 1
    %262 = vperm.xlu0 %261, %v52
    %v263 = vpop.permute.xlu0 %262
    %v265 = vlaneseq
    %v266 = vshrl.u32 %v265, 7
    %v267 = vsub.s32 0, %v266
    %v268 = vrot.slane %v30, %v267
    %v269 = vsub.f32 %v203, %v268
    %v270 = vsub.f32 %v207, %v268
    %v271 = vsub.f32 %v211, %v268
    %v272 = vsub.f32 %v215, %v268
    %v273 = vsub.f32 %v219, %v268
    %v274 = vsub.f32 %v223, %v268
    %v275 = vsub.f32 %v227, %v268
    %v276 = vsub.f32 %v231, %v268
    %v277 = vsub.f32 %v235, %v268
    %v278 = vsub.f32 %v239, %v268
    %v279 = vsub.f32 %v243, %v268
    %v280 = vsub.f32 %v247, %v268
    %v281 = vsub.f32 %v251, %v268
    %v282 = vsub.f32 %v255, %v268
    %v283 = vsub.f32 %v259, %v268
    %v284 = vsub.f32 %v263, %v268
    %v285 = vadd.f32 %v269, 1e-06
    %v286 = vadd.f32 %v270, 1e-06
    %v287 = vadd.f32 %v271, 1e-06
    %v288 = vadd.f32 %v272, 1e-06
    %v289 = vadd.f32 %v273, 1e-06
    %v290 = vadd.f32 %v274, 1e-06
    %v291 = vadd.f32 %v275, 1e-06
    %v292 = vadd.f32 %v276, 1e-06
    %v293 = vadd.f32 %v277, 1e-06
    %v294 = vadd.f32 %v278, 1e-06
    %v295 = vadd.f32 %v279, 1e-06
    %v296 = vadd.f32 %v280, 1e-06
    %v297 = vadd.f32 %v281, 1e-06
    %v298 = vadd.f32 %v282, 1e-06
    %v299 = vadd.f32 %v283, 1e-06
    %v300 = vadd.f32 %v284, 1e-06
    %301 = vset.pattern.permute.xlu0 2
    %302 = vperm.xlu0 %301, %v37
    %v303 = vpop.permute.xlu0 %302
    %305 = vset.pattern.permute.xlu0 2
    %306 = vperm.xlu0 %305, %v38
    %v307 = vpop.permute.xlu0 %306
    %309 = vset.pattern.permute.xlu0 2
    %310 = vperm.xlu0 %309, %v39
    %v311 = vpop.permute.xlu0 %310
    %313 = vset.pattern.permute.xlu0 2
    %314 = vperm.xlu0 %313, %v40
    %v315 = vpop.permute.xlu0 %314
    %317 = vset.pattern.permute.xlu0 2
    %318 = vperm.xlu0 %317, %v41
    %v319 = vpop.permute.xlu0 %318
    %321 = vset.pattern.permute.xlu0 2
    %322 = vperm.xlu0 %321, %v42
    %v323 = vpop.permute.xlu0 %322
    %325 = vset.pattern.permute.xlu0 2
    %326 = vperm.xlu0 %325, %v43
    %v327 = vpop.permute.xlu0 %326
    %329 = vset.pattern.permute.xlu0 2
    %330 = vperm.xlu0 %329, %v44
    %v331 = vpop.permute.xlu0 %330
    %333 = vset.pattern.permute.xlu0 2
    %334 = vperm.xlu0 %333, %v45
    %v335 = vpop.permute.xlu0 %334
    %337 = vset.pattern.permute.xlu0 2
    %338 = vperm.xlu0 %337, %v46
    %v339 = vpop.permute.xlu0 %338
    %341 = vset.pattern.permute.xlu0 2
    %342 = vperm.xlu0 %341, %v47
    %v343 = vpop.permute.xlu0 %342
    %345 = vset.pattern.permute.xlu0 2
    %346 = vperm.xlu0 %345, %v48
    %v347 = vpop.permute.xlu0 %346
    %349 = vset.pattern.permute.xlu0 2
    %350 = vperm.xlu0 %349, %v49
    %v351 = vpop.permute.xlu0 %350
    %353 = vset.pattern.permute.xlu0 2
    %354 = vperm.xlu0 %353, %v50
    %v355 = vpop.permute.xlu0 %354
    %357 = vset.pattern.permute.xlu0 2
    %358 = vperm.xlu0 %357, %v51
    %v359 = vpop.permute.xlu0 %358
    %361 = vset.pattern.permute.xlu0 2
    %362 = vperm.xlu0 %361, %v52
    %v363 = vpop.permute.xlu0 %362
    %v365 = vlaneseq
    %v366 = vshrl.u32 %v365, 7
    %v367 = vsub.s32 0, %v366
    %v368 = vrot.slane %v31, %v367
    %v369 = vsub.f32 %v303, %v368
    %v370 = vsub.f32 %v307, %v368
    %v371 = vsub.f32 %v311, %v368
    %v372 = vsub.f32 %v315, %v368
    %v373 = vsub.f32 %v319, %v368
    %v374 = vsub.f32 %v323, %v368
    %v375 = vsub.f32 %v327, %v368
    %v376 = vsub.f32 %v331, %v368
    %v377 = vsub.f32 %v335, %v368
    %v378 = vsub.f32 %v339, %v368
    %v379 = vsub.f32 %v343, %v368
    %v380 = vsub.f32 %v347, %v368
    %v381 = vsub.f32 %v351, %v368
    %v382 = vsub.f32 %v355, %v368
    %v383 = vsub.f32 %v359, %v368
    %v384 = vsub.f32 %v363, %v368
    %v385 = vadd.f32 %v369, 1e-06
    %v386 = vadd.f32 %v370, 1e-06
    %v387 = vadd.f32 %v371, 1e-06
    %v388 = vadd.f32 %v372, 1e-06
    %v389 = vadd.f32 %v373, 1e-06
    %v390 = vadd.f32 %v374, 1e-06
    %v391 = vadd.f32 %v375, 1e-06
    %v392 = vadd.f32 %v376, 1e-06
    %v393 = vadd.f32 %v377, 1e-06
    %v394 = vadd.f32 %v378, 1e-06
    %v395 = vadd.f32 %v379, 1e-06
    %v396 = vadd.f32 %v380, 1e-06
    %v397 = vadd.f32 %v381, 1e-06
    %v398 = vadd.f32 %v382, 1e-06
    %v399 = vadd.f32 %v383, 1e-06
    %v400 = vadd.f32 %v384, 1e-06
    %v401 = vmul.f32 %v185, %v185
    %v402 = vmul.f32 %v186, %v186
    %v403 = vmul.f32 %v187, %v187
    %v404 = vmul.f32 %v188, %v188
    %v405 = vmul.f32 %v189, %v189
    %v406 = vmul.f32 %v190, %v190
    %v407 = vmul.f32 %v191, %v191
    %v408 = vmul.f32 %v192, %v192
    %v409 = vmul.f32 %v193, %v193
    %v410 = vmul.f32 %v194, %v194
    %v411 = vmul.f32 %v195, %v195
    %v412 = vmul.f32 %v196, %v196
    %v413 = vmul.f32 %v197, %v197
    %v414 = vmul.f32 %v198, %v198
    %v415 = vmul.f32 %v199, %v199
    %v416 = vmul.f32 %v200, %v200
    %v417 = vmul.f32 %v285, %v285
    %v418 = vmul.f32 %v286, %v286
    %v419 = vmul.f32 %v287, %v287
    %v420 = vmul.f32 %v288, %v288
    %v421 = vmul.f32 %v289, %v289
    %v422 = vmul.f32 %v290, %v290
    %v423 = vmul.f32 %v291, %v291
    %v424 = vmul.f32 %v292, %v292
    %v425 = vmul.f32 %v293, %v293
    %v426 = vmul.f32 %v294, %v294
    %v427 = vmul.f32 %v295, %v295
    %v428 = vmul.f32 %v296, %v296
    %v429 = vmul.f32 %v297, %v297
    %v430 = vmul.f32 %v298, %v298
    %v431 = vmul.f32 %v299, %v299
    %v432 = vmul.f32 %v300, %v300
    %v433 = vadd.f32 %v401, %v417
    %v434 = vadd.f32 %v402, %v418
    %v435 = vadd.f32 %v403, %v419
    %v436 = vadd.f32 %v404, %v420
    %v437 = vadd.f32 %v405, %v421
    %v438 = vadd.f32 %v406, %v422
    %v439 = vadd.f32 %v407, %v423
    %v440 = vadd.f32 %v408, %v424
    %v441 = vadd.f32 %v409, %v425
    %v442 = vadd.f32 %v410, %v426
    %v443 = vadd.f32 %v411, %v427
    %v444 = vadd.f32 %v412, %v428
    %v445 = vadd.f32 %v413, %v429
    %v446 = vadd.f32 %v414, %v430
    %v447 = vadd.f32 %v415, %v431
    %v448 = vadd.f32 %v416, %v432
    %v449 = vmul.f32 %v385, %v385
    %v450 = vmul.f32 %v386, %v386
    %v451 = vmul.f32 %v387, %v387
    %v452 = vmul.f32 %v388, %v388
    %v453 = vmul.f32 %v389, %v389
    %v454 = vmul.f32 %v390, %v390
    %v455 = vmul.f32 %v391, %v391
    %v456 = vmul.f32 %v392, %v392
    %v457 = vmul.f32 %v393, %v393
    %v458 = vmul.f32 %v394, %v394
    %v459 = vmul.f32 %v395, %v395
    %v460 = vmul.f32 %v396, %v396
    %v461 = vmul.f32 %v397, %v397
    %v462 = vmul.f32 %v398, %v398
    %v463 = vmul.f32 %v399, %v399
    %v464 = vmul.f32 %v400, %v400
    %v465 = vadd.f32 %v433, %v449
    %v466 = vadd.f32 %v434, %v450
    %v467 = vadd.f32 %v435, %v451
    %v468 = vadd.f32 %v436, %v452
    %v469 = vadd.f32 %v437, %v453
    %v470 = vadd.f32 %v438, %v454
    %v471 = vadd.f32 %v439, %v455
    %v472 = vadd.f32 %v440, %v456
    %v473 = vadd.f32 %v441, %v457
    %v474 = vadd.f32 %v442, %v458
    %v475 = vadd.f32 %v443, %v459
    %v476 = vadd.f32 %v444, %v460
    %v477 = vadd.f32 %v445, %v461
    %v478 = vadd.f32 %v446, %v462
    %v479 = vadd.f32 %v447, %v463
    %v480 = vadd.f32 %v448, %v464
    %s481 = smul.u32 0, 128
    %v482 = vlaneseq
    %v483 = vshrl.u32 %v482, 7
    %v484 = vadd.s32 %v483, 8
    %v485 = vadd.s32 %v483, 16
    %v486 = vadd.s32 %v483, 24
    %v487 = vadd.s32 %v483, 32
    %v488 = vadd.s32 %v483, 40
    %v489 = vadd.s32 %v483, 48
    %v490 = vadd.s32 %v483, 56
    %v491 = vadd.s32 %v483, 64
    %v492 = vadd.s32 %v483, 72
    %v493 = vadd.s32 %v483, 80
    %v494 = vadd.s32 %v483, 88
    %v495 = vadd.s32 %v483, 96
    %v496 = vadd.s32 %v483, 104
    %v497 = vadd.s32 %v483, 112
    %v498 = vadd.s32 %v483, 120
    %v499 = vstv %s481
    %v500 = vadd.s32 %v499, %v483
    %v501 = vadd.s32 %v499, %v484
    %v502 = vadd.s32 %v499, %v485
    %v503 = vadd.s32 %v499, %v486
    %v504 = vadd.s32 %v499, %v487
    %v505 = vadd.s32 %v499, %v488
    %v506 = vadd.s32 %v499, %v489
    %v507 = vadd.s32 %v499, %v490
    %v508 = vadd.s32 %v499, %v491
    %v509 = vadd.s32 %v499, %v492
    %v510 = vadd.s32 %v499, %v493
    %v511 = vadd.s32 %v499, %v494
    %v512 = vadd.s32 %v499, %v495
    %v513 = vadd.s32 %v499, %v496
    %v514 = vadd.s32 %v499, %v497
    %v515 = vadd.s32 %v499, %v498
    %s516 = smul.u32 0, 128
    %v517 = vlaneseq
    %v518 = vand.u32 %v517, 127
    %v519 = vstv %s516
    %v520 = vadd.s32 %v519, %v518
    %521 = vset.pattern.permute.xlu0 0
    %522 = vperm.xlu0 %521, %v69
    %v523 = vpop.permute.xlu0 %522
    %524 = vset.pattern.permute.xlu0 0
    %525 = vperm.xlu0 %524, %v70
    %v526 = vpop.permute.xlu0 %525
    %527 = vset.pattern.permute.xlu0 0
    %528 = vperm.xlu0 %527, %v71
    %v529 = vpop.permute.xlu0 %528
    %530 = vset.pattern.permute.xlu0 0
    %531 = vperm.xlu0 %530, %v72
    %v532 = vpop.permute.xlu0 %531
    %533 = vset.pattern.permute.xlu0 0
    %534 = vperm.xlu0 %533, %v73
    %v535 = vpop.permute.xlu0 %534
    %536 = vset.pattern.permute.xlu0 0
    %537 = vperm.xlu0 %536, %v74
    %v538 = vpop.permute.xlu0 %537
    %539 = vset.pattern.permute.xlu0 0
    %540 = vperm.xlu0 %539, %v75
    %v541 = vpop.permute.xlu0 %540
    %542 = vset.pattern.permute.xlu0 0
    %543 = vperm.xlu0 %542, %v76
    %v544 = vpop.permute.xlu0 %543
    %545 = vset.pattern.permute.xlu0 0
    %546 = vperm.xlu0 %545, %v77
    %v547 = vpop.permute.xlu0 %546
    %548 = vset.pattern.permute.xlu0 0
    %549 = vperm.xlu0 %548, %v78
    %v550 = vpop.permute.xlu0 %549
    %551 = vset.pattern.permute.xlu0 0
    %552 = vperm.xlu0 %551, %v79
    %v553 = vpop.permute.xlu0 %552
    %554 = vset.pattern.permute.xlu0 0
    %555 = vperm.xlu0 %554, %v80
    %v556 = vpop.permute.xlu0 %555
    %557 = vset.pattern.permute.xlu0 0
    %558 = vperm.xlu0 %557, %v81
    %v559 = vpop.permute.xlu0 %558
    %560 = vset.pattern.permute.xlu0 0
    %561 = vperm.xlu0 %560, %v82
    %v562 = vpop.permute.xlu0 %561
    %563 = vset.pattern.permute.xlu0 0
    %564 = vperm.xlu0 %563, %v83
    %v565 = vpop.permute.xlu0 %564
    %566 = vset.pattern.permute.xlu0 0
    %567 = vperm.xlu0 %566, %v84
    %v568 = vpop.permute.xlu0 %567
    %v569 = vlaneseq
    %v570 = vshrl.u32 %v569, 7
    %v571 = vsub.s32 0, %v570
    %v572 = vrot.slane %v36, %v571
    %vm573 = vcmp.eq.s32.totalorder %v523, %v572
    %vm574 = vcmp.eq.s32.totalorder %v526, %v572
    %vm575 = vcmp.eq.s32.totalorder %v529, %v572
    %vm576 = vcmp.eq.s32.totalorder %v532, %v572
    %vm577 = vcmp.eq.s32.totalorder %v535, %v572
    %vm578 = vcmp.eq.s32.totalorder %v538, %v572
    %vm579 = vcmp.eq.s32.totalorder %v541, %v572
    %vm580 = vcmp.eq.s32.totalorder %v544, %v572
    %vm581 = vcmp.eq.s32.totalorder %v547, %v572
    %vm582 = vcmp.eq.s32.totalorder %v550, %v572
    %vm583 = vcmp.eq.s32.totalorder %v553, %v572
    %vm584 = vcmp.eq.s32.totalorder %v556, %v572
    %vm585 = vcmp.eq.s32.totalorder %v559, %v572
    %vm586 = vcmp.eq.s32.totalorder %v562, %v572
    %vm587 = vcmp.eq.s32.totalorder %v565, %v572
    %vm588 = vcmp.eq.s32.totalorder %v568, %v572
    %vm589 = vcmp.ne.s32.totalorder %v500, %v520
    %vm590 = vcmp.ne.s32.totalorder %v501, %v520
    %vm591 = vcmp.ne.s32.totalorder %v502, %v520
    %vm592 = vcmp.ne.s32.totalorder %v503, %v520
    %vm593 = vcmp.ne.s32.totalorder %v504, %v520
    %vm594 = vcmp.ne.s32.totalorder %v505, %v520
    %vm595 = vcmp.ne.s32.totalorder %v506, %v520
    %vm596 = vcmp.ne.s32.totalorder %v507, %v520
    %vm597 = vcmp.ne.s32.totalorder %v508, %v520
    %vm598 = vcmp.ne.s32.totalorder %v509, %v520
    %vm599 = vcmp.ne.s32.totalorder %v510, %v520
    %vm600 = vcmp.ne.s32.totalorder %v511, %v520
    %vm601 = vcmp.ne.s32.totalorder %v512, %v520
    %vm602 = vcmp.ne.s32.totalorder %v513, %v520
    %vm603 = vcmp.ne.s32.totalorder %v514, %v520
    %vm604 = vcmp.ne.s32.totalorder %v515, %v520
    %vm605 = vmand %vm573, %vm589
    %vm606 = vmand %vm574, %vm590
    %vm607 = vmand %vm575, %vm591
    %vm608 = vmand %vm576, %vm592
    %vm609 = vmand %vm577, %vm593
    %vm610 = vmand %vm578, %vm594
    %vm611 = vmand %vm579, %vm595
    %vm612 = vmand %vm580, %vm596
    %vm613 = vmand %vm581, %vm597
    %vm614 = vmand %vm582, %vm598
    %vm615 = vmand %vm583, %vm599
    %vm616 = vmand %vm584, %vm600
    %vm617 = vmand %vm585, %vm601
    %vm618 = vmand %vm586, %vm602
    %vm619 = vmand %vm587, %vm603
    %vm620 = vmand %vm588, %vm604
    %vm621 = vcmp.lt.f32.partialorder %v465, 100.0
    %vm622 = vcmp.lt.f32.partialorder %v466, 100.0
    %vm623 = vcmp.lt.f32.partialorder %v467, 100.0
    %vm624 = vcmp.lt.f32.partialorder %v468, 100.0
    %vm625 = vcmp.lt.f32.partialorder %v469, 100.0
    %vm626 = vcmp.lt.f32.partialorder %v470, 100.0
    %vm627 = vcmp.lt.f32.partialorder %v471, 100.0
    %vm628 = vcmp.lt.f32.partialorder %v472, 100.0
    %vm629 = vcmp.lt.f32.partialorder %v473, 100.0
    %vm630 = vcmp.lt.f32.partialorder %v474, 100.0
    %vm631 = vcmp.lt.f32.partialorder %v475, 100.0
    %vm632 = vcmp.lt.f32.partialorder %v476, 100.0
    %vm633 = vcmp.lt.f32.partialorder %v477, 100.0
    %vm634 = vcmp.lt.f32.partialorder %v478, 100.0
    %vm635 = vcmp.lt.f32.partialorder %v479, 100.0
    %vm636 = vcmp.lt.f32.partialorder %v480, 100.0
    %vm637 = vmand %vm605, %vm621
    %vm638 = vmand %vm606, %vm622
    %vm639 = vmand %vm607, %vm623
    %vm640 = vmand %vm608, %vm624
    %vm641 = vmand %vm609, %vm625
    %vm642 = vmand %vm610, %vm626
    %vm643 = vmand %vm611, %vm627
    %vm644 = vmand %vm612, %vm628
    %vm645 = vmand %vm613, %vm629
    %vm646 = vmand %vm614, %vm630
    %vm647 = vmand %vm615, %vm631
    %vm648 = vmand %vm616, %vm632
    %vm649 = vmand %vm617, %vm633
    %vm650 = vmand %vm618, %vm634
    %vm651 = vmand %vm619, %vm635
    %vm652 = vmand %vm620, %vm636
    %v653 = vrsqrt.pop %v465
    %v654 = vmul.f32 %v465, %v653
    %vm655 = vcmp.eq.f32.partialorder %v465, inf
    %v656 = vsel %vm655, %v465, %v654
    %vm657 = vcmp.eq.f32.partialorder %v465, 0.0
    %v658 = vand.u32 %v465, 2147483648
    %v659 = vsel %vm657, %v658, %v656
    %v660 = vrsqrt.pop %v466
    %v661 = vmul.f32 %v466, %v660
    %vm662 = vcmp.eq.f32.partialorder %v466, inf
    %v663 = vsel %vm662, %v466, %v661
    %vm664 = vcmp.eq.f32.partialorder %v466, 0.0
    %v665 = vand.u32 %v466, 2147483648
    %v666 = vsel %vm664, %v665, %v663
    %v667 = vrsqrt.pop %v467
    %v668 = vmul.f32 %v467, %v667
    %vm669 = vcmp.eq.f32.partialorder %v467, inf
    %v670 = vsel %vm669, %v467, %v668
    %vm671 = vcmp.eq.f32.partialorder %v467, 0.0
    %v672 = vand.u32 %v467, 2147483648
    %v673 = vsel %vm671, %v672, %v670
    %v674 = vrsqrt.pop %v468
    %v675 = vmul.f32 %v468, %v674
    %vm676 = vcmp.eq.f32.partialorder %v468, inf
    %v677 = vsel %vm676, %v468, %v675
    %vm678 = vcmp.eq.f32.partialorder %v468, 0.0
    %v679 = vand.u32 %v468, 2147483648
    %v680 = vsel %vm678, %v679, %v677
    %v681 = vrsqrt.pop %v469
    %v682 = vmul.f32 %v469, %v681
    %vm683 = vcmp.eq.f32.partialorder %v469, inf
    %v684 = vsel %vm683, %v469, %v682
    %vm685 = vcmp.eq.f32.partialorder %v469, 0.0
    %v686 = vand.u32 %v469, 2147483648
    %v687 = vsel %vm685, %v686, %v684
    %v688 = vrsqrt.pop %v470
    %v689 = vmul.f32 %v470, %v688
    %vm690 = vcmp.eq.f32.partialorder %v470, inf
    %v691 = vsel %vm690, %v470, %v689
    %vm692 = vcmp.eq.f32.partialorder %v470, 0.0
    %v693 = vand.u32 %v470, 2147483648
    %v694 = vsel %vm692, %v693, %v691
    %v695 = vrsqrt.pop %v471
    %v696 = vmul.f32 %v471, %v695
    %vm697 = vcmp.eq.f32.partialorder %v471, inf
    %v698 = vsel %vm697, %v471, %v696
    %vm699 = vcmp.eq.f32.partialorder %v471, 0.0
    %v700 = vand.u32 %v471, 2147483648
    %v701 = vsel %vm699, %v700, %v698
    %v702 = vrsqrt.pop %v472
    %v703 = vmul.f32 %v472, %v702
    %vm704 = vcmp.eq.f32.partialorder %v472, inf
    %v705 = vsel %vm704, %v472, %v703
    %vm706 = vcmp.eq.f32.partialorder %v472, 0.0
    %v707 = vand.u32 %v472, 2147483648
    %v708 = vsel %vm706, %v707, %v705
    %v709 = vrsqrt.pop %v473
    %v710 = vmul.f32 %v473, %v709
    %vm711 = vcmp.eq.f32.partialorder %v473, inf
    %v712 = vsel %vm711, %v473, %v710
    %vm713 = vcmp.eq.f32.partialorder %v473, 0.0
    %v714 = vand.u32 %v473, 2147483648
    %v715 = vsel %vm713, %v714, %v712
    %v716 = vrsqrt.pop %v474
    %v717 = vmul.f32 %v474, %v716
    %vm718 = vcmp.eq.f32.partialorder %v474, inf
    %v719 = vsel %vm718, %v474, %v717
    %vm720 = vcmp.eq.f32.partialorder %v474, 0.0
    %v721 = vand.u32 %v474, 2147483648
    %v722 = vsel %vm720, %v721, %v719
    %v723 = vrsqrt.pop %v475
    %v724 = vmul.f32 %v475, %v723
    %vm725 = vcmp.eq.f32.partialorder %v475, inf
    %v726 = vsel %vm725, %v475, %v724
    %vm727 = vcmp.eq.f32.partialorder %v475, 0.0
    %v728 = vand.u32 %v475, 2147483648
    %v729 = vsel %vm727, %v728, %v726
    %v730 = vrsqrt.pop %v476
    %v731 = vmul.f32 %v476, %v730
    %vm732 = vcmp.eq.f32.partialorder %v476, inf
    %v733 = vsel %vm732, %v476, %v731
    %vm734 = vcmp.eq.f32.partialorder %v476, 0.0
    %v735 = vand.u32 %v476, 2147483648
    %v736 = vsel %vm734, %v735, %v733
    %v737 = vrsqrt.pop %v477
    %v738 = vmul.f32 %v477, %v737
    %vm739 = vcmp.eq.f32.partialorder %v477, inf
    %v740 = vsel %vm739, %v477, %v738
    %vm741 = vcmp.eq.f32.partialorder %v477, 0.0
    %v742 = vand.u32 %v477, 2147483648
    %v743 = vsel %vm741, %v742, %v740
    %v744 = vrsqrt.pop %v478
    %v745 = vmul.f32 %v478, %v744
    %vm746 = vcmp.eq.f32.partialorder %v478, inf
    %v747 = vsel %vm746, %v478, %v745
    %vm748 = vcmp.eq.f32.partialorder %v478, 0.0
    %v749 = vand.u32 %v478, 2147483648
    %v750 = vsel %vm748, %v749, %v747
    %v751 = vrsqrt.pop %v479
    %v752 = vmul.f32 %v479, %v751
    %vm753 = vcmp.eq.f32.partialorder %v479, inf
    %v754 = vsel %vm753, %v479, %v752
    %vm755 = vcmp.eq.f32.partialorder %v479, 0.0
    %v756 = vand.u32 %v479, 2147483648
    %v757 = vsel %vm755, %v756, %v754
    %v758 = vrsqrt.pop %v480
    %v759 = vmul.f32 %v480, %v758
    %vm760 = vcmp.eq.f32.partialorder %v480, inf
    %v761 = vsel %vm760, %v480, %v759
    %vm762 = vcmp.eq.f32.partialorder %v480, 0.0
    %v763 = vand.u32 %v480, 2147483648
    %v764 = vsel %vm762, %v763, %v761
    %v765 = vsel %vm637, %v659, 1.0
    %v766 = vsel %vm638, %v666, 1.0
    %v767 = vsel %vm639, %v673, 1.0
    %v768 = vsel %vm640, %v680, 1.0
    %v769 = vsel %vm641, %v687, 1.0
    %v770 = vsel %vm642, %v694, 1.0
    %v771 = vsel %vm643, %v701, 1.0
    %v772 = vsel %vm644, %v708, 1.0
    %v773 = vsel %vm645, %v715, 1.0
    %v774 = vsel %vm646, %v722, 1.0
    %v775 = vsel %vm647, %v729, 1.0
    %v776 = vsel %vm648, %v736, 1.0
    %v777 = vsel %vm649, %v743, 1.0
    %v778 = vsel %vm650, %v750, 1.0
    %v779 = vsel %vm651, %v757, 1.0
    %v780 = vsel %vm652, %v764, 1.0
    %v781 = vrcp.pop %v765
    %v782 = vmul.f32 1.0, %v781
    %v783 = vrcp.pop %v766
    %v784 = vmul.f32 1.0, %v783
    %v785 = vrcp.pop %v767
    %v786 = vmul.f32 1.0, %v785
    %v787 = vrcp.pop %v768
    %v788 = vmul.f32 1.0, %v787
    %v789 = vrcp.pop %v769
    %v790 = vmul.f32 1.0, %v789
    %v791 = vrcp.pop %v770
    %v792 = vmul.f32 1.0, %v791
    %v793 = vrcp.pop %v771
    %v794 = vmul.f32 1.0, %v793
    %v795 = vrcp.pop %v772
    %v796 = vmul.f32 1.0, %v795
    %v797 = vrcp.pop %v773
    %v798 = vmul.f32 1.0, %v797
    %v799 = vrcp.pop %v774
    %v800 = vmul.f32 1.0, %v799
    %v801 = vrcp.pop %v775
    %v802 = vmul.f32 1.0, %v801
    %v803 = vrcp.pop %v776
    %v804 = vmul.f32 1.0, %v803
    %v805 = vrcp.pop %v777
    %v806 = vmul.f32 1.0, %v805
    %v807 = vrcp.pop %v778
    %v808 = vmul.f32 1.0, %v807
    %v809 = vrcp.pop %v779
    %v810 = vmul.f32 1.0, %v809
    %v811 = vrcp.pop %v780
    %v812 = vmul.f32 1.0, %v811
    %814 = vset.pattern.permute.xlu0 2
    %815 = vperm.xlu0 %814, %v53
    %v816 = vpop.permute.xlu0 %815
    %819 = vset.pattern.permute.xlu0 2
    %820 = vperm.xlu0 %819, %v54
    %v821 = vpop.permute.xlu0 %820
    %824 = vset.pattern.permute.xlu0 2
    %825 = vperm.xlu0 %824, %v55
    %v826 = vpop.permute.xlu0 %825
    %829 = vset.pattern.permute.xlu0 2
    %830 = vperm.xlu0 %829, %v56
    %v831 = vpop.permute.xlu0 %830
    %834 = vset.pattern.permute.xlu0 2
    %835 = vperm.xlu0 %834, %v57
    %v836 = vpop.permute.xlu0 %835
    %839 = vset.pattern.permute.xlu0 2
    %840 = vperm.xlu0 %839, %v58
    %v841 = vpop.permute.xlu0 %840
    %844 = vset.pattern.permute.xlu0 2
    %845 = vperm.xlu0 %844, %v59
    %v846 = vpop.permute.xlu0 %845
    %849 = vset.pattern.permute.xlu0 2
    %850 = vperm.xlu0 %849, %v60
    %v851 = vpop.permute.xlu0 %850
    %854 = vset.pattern.permute.xlu0 2
    %855 = vperm.xlu0 %854, %v61
    %v856 = vpop.permute.xlu0 %855
    %859 = vset.pattern.permute.xlu0 2
    %860 = vperm.xlu0 %859, %v62
    %v861 = vpop.permute.xlu0 %860
    %864 = vset.pattern.permute.xlu0 2
    %865 = vperm.xlu0 %864, %v63
    %v866 = vpop.permute.xlu0 %865
    %869 = vset.pattern.permute.xlu0 2
    %870 = vperm.xlu0 %869, %v64
    %v871 = vpop.permute.xlu0 %870
    %874 = vset.pattern.permute.xlu0 2
    %875 = vperm.xlu0 %874, %v65
    %v876 = vpop.permute.xlu0 %875
    %879 = vset.pattern.permute.xlu0 2
    %880 = vperm.xlu0 %879, %v66
    %v881 = vpop.permute.xlu0 %880
    %884 = vset.pattern.permute.xlu0 2
    %885 = vperm.xlu0 %884, %v67
    %v886 = vpop.permute.xlu0 %885
    %889 = vset.pattern.permute.xlu0 2
    %890 = vperm.xlu0 %889, %v68
    %v891 = vpop.permute.xlu0 %890
    %v893 = vadd.f32 %v765, %v816
    %v894 = vadd.f32 %v766, %v821
    %v895 = vadd.f32 %v767, %v826
    %v896 = vadd.f32 %v768, %v831
    %v897 = vadd.f32 %v769, %v836
    %v898 = vadd.f32 %v770, %v841
    %v899 = vadd.f32 %v771, %v846
    %v900 = vadd.f32 %v772, %v851
    %v901 = vadd.f32 %v773, %v856
    %v902 = vadd.f32 %v774, %v861
    %v903 = vadd.f32 %v775, %v866
    %v904 = vadd.f32 %v776, %v871
    %v905 = vadd.f32 %v777, %v876
    %v906 = vadd.f32 %v778, %v881
    %v907 = vadd.f32 %v779, %v886
    %v908 = vadd.f32 %v780, %v891
    %v909 = vsub.f32 %v765, %v816
    %v910 = vsub.f32 %v766, %v821
    %v911 = vsub.f32 %v767, %v826
    %v912 = vsub.f32 %v768, %v831
    %v913 = vsub.f32 %v769, %v836
    %v914 = vsub.f32 %v770, %v841
    %v915 = vsub.f32 %v771, %v846
    %v916 = vsub.f32 %v772, %v851
    %v917 = vsub.f32 %v773, %v856
    %v918 = vsub.f32 %v774, %v861
    %v919 = vsub.f32 %v775, %v866
    %v920 = vsub.f32 %v776, %v871
    %v921 = vsub.f32 %v777, %v876
    %v922 = vsub.f32 %v778, %v881
    %v923 = vsub.f32 %v779, %v886
    %v924 = vsub.f32 %v780, %v891
    %v925 = vand.u32 2147483647, %v909
    %v926 = vand.u32 2147483647, %v910
    %v927 = vand.u32 2147483647, %v911
    %v928 = vand.u32 2147483647, %v912
    %v929 = vand.u32 2147483647, %v913
    %v930 = vand.u32 2147483647, %v914
    %v931 = vand.u32 2147483647, %v915
    %v932 = vand.u32 2147483647, %v916
    %v933 = vand.u32 2147483647, %v917
    %v934 = vand.u32 2147483647, %v918
    %v935 = vand.u32 2147483647, %v919
    %v936 = vand.u32 2147483647, %v920
    %v937 = vand.u32 2147483647, %v921
    %v938 = vand.u32 2147483647, %v922
    %v939 = vand.u32 2147483647, %v923
    %v940 = vand.u32 2147483647, %v924
    %v941 = vlaneseq
    %v942 = vshrl.u32 %v941, 7
    %v943 = vsub.s32 0, %v942
    %v944 = vrot.slane %v33, %v943
    %v945 = vmax.f32 %v925, %v944
    %v946 = vmax.f32 %v926, %v944
    %v947 = vmax.f32 %v927, %v944
    %v948 = vmax.f32 %v928, %v944
    %v949 = vmax.f32 %v929, %v944
    %v950 = vmax.f32 %v930, %v944
    %v951 = vmax.f32 %v931, %v944
    %v952 = vmax.f32 %v932, %v944
    %v953 = vmax.f32 %v933, %v944
    %v954 = vmax.f32 %v934, %v944
    %v955 = vmax.f32 %v935, %v944
    %v956 = vmax.f32 %v936, %v944
    %v957 = vmax.f32 %v937, %v944
    %v958 = vmax.f32 %v938, %v944
    %v959 = vmax.f32 %v939, %v944
    %v960 = vmax.f32 %v940, %v944
    %v961 = vmul.f32 %v945, %v893
    %v962 = vmul.f32 %v946, %v894
    %v963 = vmul.f32 %v947, %v895
    %v964 = vmul.f32 %v948, %v896
    %v965 = vmul.f32 %v949, %v897
    %v966 = vmul.f32 %v950, %v898
    %v967 = vmul.f32 %v951, %v899
    %v968 = vmul.f32 %v952, %v900
    %v969 = vmul.f32 %v953, %v901
    %v970 = vmul.f32 %v954, %v902
    %v971 = vmul.f32 %v955, %v903
    %v972 = vmul.f32 %v956, %v904
    %v973 = vmul.f32 %v957, %v905
    %v974 = vmul.f32 %v958, %v906
    %v975 = vmul.f32 %v959, %v907
    %v976 = vmul.f32 %v960, %v908
    %v977 = vrcp.pop %v961
    %v978 = vmul.f32 1.0, %v977
    %v979 = vrcp.pop %v962
    %v980 = vmul.f32 1.0, %v979
    %v981 = vrcp.pop %v963
    %v982 = vmul.f32 1.0, %v981
    %v983 = vrcp.pop %v964
    %v984 = vmul.f32 1.0, %v983
    %v985 = vrcp.pop %v965
    %v986 = vmul.f32 1.0, %v985
    %v987 = vrcp.pop %v966
    %v988 = vmul.f32 1.0, %v987
    %v989 = vrcp.pop %v967
    %v990 = vmul.f32 1.0, %v989
    %v991 = vrcp.pop %v968
    %v992 = vmul.f32 1.0, %v991
    %v993 = vrcp.pop %v969
    %v994 = vmul.f32 1.0, %v993
    %v995 = vrcp.pop %v970
    %v996 = vmul.f32 1.0, %v995
    %v997 = vrcp.pop %v971
    %v998 = vmul.f32 1.0, %v997
    %v999 = vrcp.pop %v972
    %v1000 = vmul.f32 1.0, %v999
    %v1001 = vrcp.pop %v973
    %v1002 = vmul.f32 1.0, %v1001
    %v1003 = vrcp.pop %v974
    %v1004 = vmul.f32 1.0, %v1003
    %v1005 = vrcp.pop %v975
    %v1006 = vmul.f32 1.0, %v1005
    %v1007 = vrcp.pop %v976
    %v1008 = vmul.f32 1.0, %v1007
    %v1009 = vmul.f32 %v893, %v978
    %v1010 = vmul.f32 %v894, %v980
    %v1011 = vmul.f32 %v895, %v982
    %v1012 = vmul.f32 %v896, %v984
    %v1013 = vmul.f32 %v897, %v986
    %v1014 = vmul.f32 %v898, %v988
    %v1015 = vmul.f32 %v899, %v990
    %v1016 = vmul.f32 %v900, %v992
    %v1017 = vmul.f32 %v901, %v994
    %v1018 = vmul.f32 %v902, %v996
    %v1019 = vmul.f32 %v903, %v998
    %v1020 = vmul.f32 %v904, %v1000
    %v1021 = vmul.f32 %v905, %v1002
    %v1022 = vmul.f32 %v906, %v1004
    %v1023 = vmul.f32 %v907, %v1006
    %v1024 = vmul.f32 %v908, %v1008
    %v1025 = vmul.f32 %v945, %v978
    %v1026 = vmul.f32 %v946, %v980
    %v1027 = vmul.f32 %v947, %v982
    %v1028 = vmul.f32 %v948, %v984
    %v1029 = vmul.f32 %v949, %v986
    %v1030 = vmul.f32 %v950, %v988
    %v1031 = vmul.f32 %v951, %v990
    %v1032 = vmul.f32 %v952, %v992
    %v1033 = vmul.f32 %v953, %v994
    %v1034 = vmul.f32 %v954, %v996
    %v1035 = vmul.f32 %v955, %v998
    %v1036 = vmul.f32 %v956, %v1000
    %v1037 = vmul.f32 %v957, %v1002
    %v1038 = vmul.f32 %v958, %v1004
    %v1039 = vmul.f32 %v959, %v1006
    %v1040 = vmul.f32 %v960, %v1008
    %v1041 = vsub.f32 %v1009, %v1025
    %v1042 = vsub.f32 %v1010, %v1026
    %v1043 = vsub.f32 %v1011, %v1027
    %v1044 = vsub.f32 %v1012, %v1028
    %v1045 = vsub.f32 %v1013, %v1029
    %v1046 = vsub.f32 %v1014, %v1030
    %v1047 = vsub.f32 %v1015, %v1031
    %v1048 = vsub.f32 %v1016, %v1032
    %v1049 = vsub.f32 %v1017, %v1033
    %v1050 = vsub.f32 %v1018, %v1034
    %v1051 = vsub.f32 %v1019, %v1035
    %v1052 = vsub.f32 %v1020, %v1036
    %v1053 = vsub.f32 %v1021, %v1037
    %v1054 = vsub.f32 %v1022, %v1038
    %v1055 = vsub.f32 %v1023, %v1039
    %v1056 = vsub.f32 %v1024, %v1040
    %v1057 = vmul.f32 %v53, %v53
    %v1058 = vmul.f32 %v54, %v54
    %v1059 = vmul.f32 %v55, %v55
    %v1060 = vmul.f32 %v56, %v56
    %v1061 = vmul.f32 %v57, %v57
    %v1062 = vmul.f32 %v58, %v58
    %v1063 = vmul.f32 %v59, %v59
    %v1064 = vmul.f32 %v60, %v60
    %v1065 = vmul.f32 %v61, %v61
    %v1066 = vmul.f32 %v62, %v62
    %v1067 = vmul.f32 %v63, %v63
    %v1068 = vmul.f32 %v64, %v64
    %v1069 = vmul.f32 %v65, %v65
    %v1070 = vmul.f32 %v66, %v66
    %v1071 = vmul.f32 %v67, %v67
    %v1072 = vmul.f32 %v68, %v68
    %1074 = vset.pattern.permute.xlu0 2
    %1075 = vperm.xlu0 %1074, %v1057
    %v1076 = vpop.permute.xlu0 %1075
    %1079 = vset.pattern.permute.xlu0 2
    %1080 = vperm.xlu0 %1079, %v1058
    %v1081 = vpop.permute.xlu0 %1080
    %1084 = vset.pattern.permute.xlu0 2
    %1085 = vperm.xlu0 %1084, %v1059
    %v1086 = vpop.permute.xlu0 %1085
    %1089 = vset.pattern.permute.xlu0 2
    %1090 = vperm.xlu0 %1089, %v1060
    %v1091 = vpop.permute.xlu0 %1090
    %1094 = vset.pattern.permute.xlu0 2
    %1095 = vperm.xlu0 %1094, %v1061
    %v1096 = vpop.permute.xlu0 %1095
    %1099 = vset.pattern.permute.xlu0 2
    %1100 = vperm.xlu0 %1099, %v1062
    %v1101 = vpop.permute.xlu0 %1100
    %1104 = vset.pattern.permute.xlu0 2
    %1105 = vperm.xlu0 %1104, %v1063
    %v1106 = vpop.permute.xlu0 %1105
    %1109 = vset.pattern.permute.xlu0 2
    %1110 = vperm.xlu0 %1109, %v1064
    %v1111 = vpop.permute.xlu0 %1110
    %1114 = vset.pattern.permute.xlu0 2
    %1115 = vperm.xlu0 %1114, %v1065
    %v1116 = vpop.permute.xlu0 %1115
    %1119 = vset.pattern.permute.xlu0 2
    %1120 = vperm.xlu0 %1119, %v1066
    %v1121 = vpop.permute.xlu0 %1120
    %1124 = vset.pattern.permute.xlu0 2
    %1125 = vperm.xlu0 %1124, %v1067
    %v1126 = vpop.permute.xlu0 %1125
    %1129 = vset.pattern.permute.xlu0 2
    %1130 = vperm.xlu0 %1129, %v1068
    %v1131 = vpop.permute.xlu0 %1130
    %1134 = vset.pattern.permute.xlu0 2
    %1135 = vperm.xlu0 %1134, %v1069
    %v1136 = vpop.permute.xlu0 %1135
    %1139 = vset.pattern.permute.xlu0 2
    %1140 = vperm.xlu0 %1139, %v1070
    %v1141 = vpop.permute.xlu0 %1140
    %1144 = vset.pattern.permute.xlu0 2
    %1145 = vperm.xlu0 %1144, %v1071
    %v1146 = vpop.permute.xlu0 %1145
    %1149 = vset.pattern.permute.xlu0 2
    %1150 = vperm.xlu0 %1149, %v1072
    %v1151 = vpop.permute.xlu0 %1150
    %v1153 = vmul.f32 %v1076, %v782
    %v1154 = vmul.f32 %v1081, %v784
    %v1155 = vmul.f32 %v1086, %v786
    %v1156 = vmul.f32 %v1091, %v788
    %v1157 = vmul.f32 %v1096, %v790
    %v1158 = vmul.f32 %v1101, %v792
    %v1159 = vmul.f32 %v1106, %v794
    %v1160 = vmul.f32 %v1111, %v796
    %v1161 = vmul.f32 %v1116, %v798
    %v1162 = vmul.f32 %v1121, %v800
    %v1163 = vmul.f32 %v1126, %v802
    %v1164 = vmul.f32 %v1131, %v804
    %v1165 = vmul.f32 %v1136, %v806
    %v1166 = vmul.f32 %v1141, %v808
    %v1167 = vmul.f32 %v1146, %v810
    %v1168 = vmul.f32 %v1151, %v812
    %v1169 = vsub.f32 %v765, %v1153
    %v1170 = vsub.f32 %v766, %v1154
    %v1171 = vsub.f32 %v767, %v1155
    %v1172 = vsub.f32 %v768, %v1156
    %v1173 = vsub.f32 %v769, %v1157
    %v1174 = vsub.f32 %v770, %v1158
    %v1175 = vsub.f32 %v771, %v1159
    %v1176 = vsub.f32 %v772, %v1160
    %v1177 = vsub.f32 %v773, %v1161
    %v1178 = vsub.f32 %v774, %v1162
    %v1179 = vsub.f32 %v775, %v1163
    %v1180 = vsub.f32 %v776, %v1164
    %v1181 = vsub.f32 %v777, %v1165
    %v1182 = vsub.f32 %v778, %v1166
    %v1183 = vsub.f32 %v779, %v1167
    %v1184 = vsub.f32 %v780, %v1168
    %v1185 = vmul.f32 %v1169, 0.25
    %v1186 = vmul.f32 %v1170, 0.25
    %v1187 = vmul.f32 %v1171, 0.25
    %v1188 = vmul.f32 %v1172, 0.25
    %v1189 = vmul.f32 %v1173, 0.25
    %v1190 = vmul.f32 %v1174, 0.25
    %v1191 = vmul.f32 %v1175, 0.25
    %v1192 = vmul.f32 %v1176, 0.25
    %v1193 = vmul.f32 %v1177, 0.25
    %v1194 = vmul.f32 %v1178, 0.25
    %v1195 = vmul.f32 %v1179, 0.25
    %v1196 = vmul.f32 %v1180, 0.25
    %v1197 = vmul.f32 %v1181, 0.25
    %v1198 = vmul.f32 %v1182, 0.25
    %v1199 = vmul.f32 %v1183, 0.25
    %v1200 = vmul.f32 %v1184, 0.25
    %v1201 = vmul.f32 %v1025, %v1025
    %v1202 = vmul.f32 %v1026, %v1026
    %v1203 = vmul.f32 %v1027, %v1027
    %v1204 = vmul.f32 %v1028, %v1028
    %v1205 = vmul.f32 %v1029, %v1029
    %v1206 = vmul.f32 %v1030, %v1030
    %v1207 = vmul.f32 %v1031, %v1031
    %v1208 = vmul.f32 %v1032, %v1032
    %v1209 = vmul.f32 %v1033, %v1033
    %v1210 = vmul.f32 %v1034, %v1034
    %v1211 = vmul.f32 %v1035, %v1035
    %v1212 = vmul.f32 %v1036, %v1036
    %v1213 = vmul.f32 %v1037, %v1037
    %v1214 = vmul.f32 %v1038, %v1038
    %v1215 = vmul.f32 %v1039, %v1039
    %v1216 = vmul.f32 %v1040, %v1040
    %v1217 = vmul.f32 %v1009, %v1009
    %v1218 = vmul.f32 %v1010, %v1010
    %v1219 = vmul.f32 %v1011, %v1011
    %v1220 = vmul.f32 %v1012, %v1012
    %v1221 = vmul.f32 %v1013, %v1013
    %v1222 = vmul.f32 %v1014, %v1014
    %v1223 = vmul.f32 %v1015, %v1015
    %v1224 = vmul.f32 %v1016, %v1016
    %v1225 = vmul.f32 %v1017, %v1017
    %v1226 = vmul.f32 %v1018, %v1018
    %v1227 = vmul.f32 %v1019, %v1019
    %v1228 = vmul.f32 %v1020, %v1020
    %v1229 = vmul.f32 %v1021, %v1021
    %v1230 = vmul.f32 %v1022, %v1022
    %v1231 = vmul.f32 %v1023, %v1023
    %v1232 = vmul.f32 %v1024, %v1024
    %v1233 = vsub.f32 %v1201, %v1217
    %v1234 = vsub.f32 %v1202, %v1218
    %v1235 = vsub.f32 %v1203, %v1219
    %v1236 = vsub.f32 %v1204, %v1220
    %v1237 = vsub.f32 %v1205, %v1221
    %v1238 = vsub.f32 %v1206, %v1222
    %v1239 = vsub.f32 %v1207, %v1223
    %v1240 = vsub.f32 %v1208, %v1224
    %v1241 = vsub.f32 %v1209, %v1225
    %v1242 = vsub.f32 %v1210, %v1226
    %v1243 = vsub.f32 %v1211, %v1227
    %v1244 = vsub.f32 %v1212, %v1228
    %v1245 = vsub.f32 %v1213, %v1229
    %v1246 = vsub.f32 %v1214, %v1230
    %v1247 = vsub.f32 %v1215, %v1231
    %v1248 = vsub.f32 %v1216, %v1232
    %v1249 = vmul.f32 %v1185, %v1233
    %v1250 = vmul.f32 %v1186, %v1234
    %v1251 = vmul.f32 %v1187, %v1235
    %v1252 = vmul.f32 %v1188, %v1236
    %v1253 = vmul.f32 %v1189, %v1237
    %v1254 = vmul.f32 %v1190, %v1238
    %v1255 = vmul.f32 %v1191, %v1239
    %v1256 = vmul.f32 %v1192, %v1240
    %v1257 = vmul.f32 %v1193, %v1241
    %v1258 = vmul.f32 %v1194, %v1242
    %v1259 = vmul.f32 %v1195, %v1243
    %v1260 = vmul.f32 %v1196, %v1244
    %v1261 = vmul.f32 %v1197, %v1245
    %v1262 = vmul.f32 %v1198, %v1246
    %v1263 = vmul.f32 %v1199, %v1247
    %v1264 = vmul.f32 %v1200, %v1248
    %v1265 = vadd.f32 %v1041, %v1249
    %v1266 = vadd.f32 %v1042, %v1250
    %v1267 = vadd.f32 %v1043, %v1251
    %v1268 = vadd.f32 %v1044, %v1252
    %v1269 = vadd.f32 %v1045, %v1253
    %v1270 = vadd.f32 %v1046, %v1254
    %v1271 = vadd.f32 %v1047, %v1255
    %v1272 = vadd.f32 %v1048, %v1256
    %v1273 = vadd.f32 %v1049, %v1257
    %v1274 = vadd.f32 %v1050, %v1258
    %v1275 = vadd.f32 %v1051, %v1259
    %v1276 = vadd.f32 %v1052, %v1260
    %v1277 = vadd.f32 %v1053, %v1261
    %v1278 = vadd.f32 %v1054, %v1262
    %v1279 = vadd.f32 %v1055, %v1263
    %v1280 = vadd.f32 %v1056, %v1264
    %v1281 = vmul.f32 %v782, 0.5
    %v1282 = vmul.f32 %v784, 0.5
    %v1283 = vmul.f32 %v786, 0.5
    %v1284 = vmul.f32 %v788, 0.5
    %v1285 = vmul.f32 %v790, 0.5
    %v1286 = vmul.f32 %v792, 0.5
    %v1287 = vmul.f32 %v794, 0.5
    %v1288 = vmul.f32 %v796, 0.5
    %v1289 = vmul.f32 %v798, 0.5
    %v1290 = vmul.f32 %v800, 0.5
    %v1291 = vmul.f32 %v802, 0.5
    %v1292 = vmul.f32 %v804, 0.5
    %v1293 = vmul.f32 %v806, 0.5
    %v1294 = vmul.f32 %v808, 0.5
    %v1295 = vmul.f32 %v810, 0.5
    %v1296 = vmul.f32 %v812, 0.5
    %v1297 = vmul.f32 %v945, %v1025
    %v1298 = vmul.f32 %v946, %v1026
    %v1299 = vmul.f32 %v947, %v1027
    %v1300 = vmul.f32 %v948, %v1028
    %v1301 = vmul.f32 %v949, %v1029
    %v1302 = vmul.f32 %v950, %v1030
    %v1303 = vmul.f32 %v951, %v1031
    %v1304 = vmul.f32 %v952, %v1032
    %v1305 = vmul.f32 %v953, %v1033
    %v1306 = vmul.f32 %v954, %v1034
    %v1307 = vmul.f32 %v955, %v1035
    %v1308 = vmul.f32 %v956, %v1036
    %v1309 = vmul.f32 %v957, %v1037
    %v1310 = vmul.f32 %v958, %v1038
    %v1311 = vmul.f32 %v959, %v1039
    %v1312 = vmul.f32 %v960, %v1040
    %v1313 = vlog2.pop %v1297
    %v1314 = vmul.f32 %v1313, 0.6931472
    %v1315 = vlog2.pop %v1298
    %v1316 = vmul.f32 %v1315, 0.6931472
    %v1317 = vlog2.pop %v1299
    %v1318 = vmul.f32 %v1317, 0.6931472
    %v1319 = vlog2.pop %v1300
    %v1320 = vmul.f32 %v1319, 0.6931472
    %v1321 = vlog2.pop %v1301
    %v1322 = vmul.f32 %v1321, 0.6931472
    %v1323 = vlog2.pop %v1302
    %v1324 = vmul.f32 %v1323, 0.6931472
    %v1325 = vlog2.pop %v1303
    %v1326 = vmul.f32 %v1325, 0.6931472
    %v1327 = vlog2.pop %v1304
    %v1328 = vmul.f32 %v1327, 0.6931472
    %v1329 = vlog2.pop %v1305
    %v1330 = vmul.f32 %v1329, 0.6931472
    %v1331 = vlog2.pop %v1306
    %v1332 = vmul.f32 %v1331, 0.6931472
    %v1333 = vlog2.pop %v1307
    %v1334 = vmul.f32 %v1333, 0.6931472
    %v1335 = vlog2.pop %v1308
    %v1336 = vmul.f32 %v1335, 0.6931472
    %v1337 = vlog2.pop %v1309
    %v1338 = vmul.f32 %v1337, 0.6931472
    %v1339 = vlog2.pop %v1310
    %v1340 = vmul.f32 %v1339, 0.6931472
    %v1341 = vlog2.pop %v1311
    %v1342 = vmul.f32 %v1341, 0.6931472
    %v1343 = vlog2.pop %v1312
    %v1344 = vmul.f32 %v1343, 0.6931472
    %v1345 = vmul.f32 %v1281, %v1314
    %v1346 = vmul.f32 %v1282, %v1316
    %v1347 = vmul.f32 %v1283, %v1318
    %v1348 = vmul.f32 %v1284, %v1320
    %v1349 = vmul.f32 %v1285, %v1322
    %v1350 = vmul.f32 %v1286, %v1324
    %v1351 = vmul.f32 %v1287, %v1326
    %v1352 = vmul.f32 %v1288, %v1328
    %v1353 = vmul.f32 %v1289, %v1330
    %v1354 = vmul.f32 %v1290, %v1332
    %v1355 = vmul.f32 %v1291, %v1334
    %v1356 = vmul.f32 %v1292, %v1336
    %v1357 = vmul.f32 %v1293, %v1338
    %v1358 = vmul.f32 %v1294, %v1340
    %v1359 = vmul.f32 %v1295, %v1342
    %v1360 = vmul.f32 %v1296, %v1344
    %v1361 = vadd.f32 %v1265, %v1345
    %v1362 = vadd.f32 %v1266, %v1346
    %v1363 = vadd.f32 %v1267, %v1347
    %v1364 = vadd.f32 %v1268, %v1348
    %v1365 = vadd.f32 %v1269, %v1349
    %v1366 = vadd.f32 %v1270, %v1350
    %v1367 = vadd.f32 %v1271, %v1351
    %v1368 = vadd.f32 %v1272, %v1352
    %v1369 = vadd.f32 %v1273, %v1353
    %v1370 = vadd.f32 %v1274, %v1354
    %v1371 = vadd.f32 %v1275, %v1355
    %v1372 = vadd.f32 %v1276, %v1356
    %v1373 = vadd.f32 %v1277, %v1357
    %v1374 = vadd.f32 %v1278, %v1358
    %v1375 = vadd.f32 %v1279, %v1359
    %v1376 = vadd.f32 %v1280, %v1360
    %v1377 = vmul.f32 %v1361, 0.5
    %v1378 = vmul.f32 %v1362, 0.5
    %v1379 = vmul.f32 %v1363, 0.5
    %v1380 = vmul.f32 %v1364, 0.5
    %v1381 = vmul.f32 %v1365, 0.5
    %v1382 = vmul.f32 %v1366, 0.5
    %v1383 = vmul.f32 %v1367, 0.5
    %v1384 = vmul.f32 %v1368, 0.5
    %v1385 = vmul.f32 %v1369, 0.5
    %v1386 = vmul.f32 %v1370, 0.5
    %v1387 = vmul.f32 %v1371, 0.5
    %v1388 = vmul.f32 %v1372, 0.5
    %v1389 = vmul.f32 %v1373, 0.5
    %v1390 = vmul.f32 %v1374, 0.5
    %v1391 = vmul.f32 %v1375, 0.5
    %v1392 = vmul.f32 %v1376, 0.5
    %v1393 = vsub.f32 %v816, %v765
    %v1394 = vsub.f32 %v821, %v766
    %v1395 = vsub.f32 %v826, %v767
    %v1396 = vsub.f32 %v831, %v768
    %v1397 = vsub.f32 %v836, %v769
    %v1398 = vsub.f32 %v841, %v770
    %v1399 = vsub.f32 %v846, %v771
    %v1400 = vsub.f32 %v851, %v772
    %v1401 = vsub.f32 %v856, %v773
    %v1402 = vsub.f32 %v861, %v774
    %v1403 = vsub.f32 %v866, %v775
    %v1404 = vsub.f32 %v871, %v776
    %v1405 = vsub.f32 %v876, %v777
    %v1406 = vsub.f32 %v881, %v778
    %v1407 = vsub.f32 %v886, %v779
    %v1408 = vsub.f32 %v891, %v780
    %vm1409 = vcmp.lt.f32.partialorder %v944, %v1393
    %vm1410 = vcmp.lt.f32.partialorder %v944, %v1394
    %vm1411 = vcmp.lt.f32.partialorder %v944, %v1395
    %vm1412 = vcmp.lt.f32.partialorder %v944, %v1396
    %vm1413 = vcmp.lt.f32.partialorder %v944, %v1397
    %vm1414 = vcmp.lt.f32.partialorder %v944, %v1398
    %vm1415 = vcmp.lt.f32.partialorder %v944, %v1399
    %vm1416 = vcmp.lt.f32.partialorder %v944, %v1400
    %vm1417 = vcmp.lt.f32.partialorder %v944, %v1401
    %vm1418 = vcmp.lt.f32.partialorder %v944, %v1402
    %vm1419 = vcmp.lt.f32.partialorder %v944, %v1403
    %vm1420 = vcmp.lt.f32.partialorder %v944, %v1404
    %vm1421 = vcmp.lt.f32.partialorder %v944, %v1405
    %vm1422 = vcmp.lt.f32.partialorder %v944, %v1406
    %vm1423 = vcmp.lt.f32.partialorder %v944, %v1407
    %vm1424 = vcmp.lt.f32.partialorder %v944, %v1408
    %v1425 = vlaneseq
    %v1426 = vshrl.u32 %v1425, 7
    %v1427 = vsub.s32 0, %v1426
    %v1428 = vrot.slane %v35, %v1427
    %v1429 = vsub.f32 %v1428, %v1009
    %v1430 = vsub.f32 %v1428, %v1010
    %v1431 = vsub.f32 %v1428, %v1011
    %v1432 = vsub.f32 %v1428, %v1012
    %v1433 = vsub.f32 %v1428, %v1013
    %v1434 = vsub.f32 %v1428, %v1014
    %v1435 = vsub.f32 %v1428, %v1015
    %v1436 = vsub.f32 %v1428, %v1016
    %v1437 = vsub.f32 %v1428, %v1017
    %v1438 = vsub.f32 %v1428, %v1018
    %v1439 = vsub.f32 %v1428, %v1019
    %v1440 = vsub.f32 %v1428, %v1020
    %v1441 = vsub.f32 %v1428, %v1021
    %v1442 = vsub.f32 %v1428, %v1022
    %v1443 = vsub.f32 %v1428, %v1023
    %v1444 = vsub.f32 %v1428, %v1024
    %v1445 = vmul.f32 %v1429, 2.0
    %v1446 = vmul.f32 %v1430, 2.0
    %v1447 = vmul.f32 %v1431, 2.0
    %v1448 = vmul.f32 %v1432, 2.0
    %v1449 = vmul.f32 %v1433, 2.0
    %v1450 = vmul.f32 %v1434, 2.0
    %v1451 = vmul.f32 %v1435, 2.0
    %v1452 = vmul.f32 %v1436, 2.0
    %v1453 = vmul.f32 %v1437, 2.0
    %v1454 = vmul.f32 %v1438, 2.0
    %v1455 = vmul.f32 %v1439, 2.0
    %v1456 = vmul.f32 %v1440, 2.0
    %v1457 = vmul.f32 %v1441, 2.0
    %v1458 = vmul.f32 %v1442, 2.0
    %v1459 = vmul.f32 %v1443, 2.0
    %v1460 = vmul.f32 %v1444, 2.0
    %v1461 = vsel %vm1409, %v1445, 0.0
    %v1462 = vsel %vm1410, %v1446, 0.0
    %v1463 = vsel %vm1411, %v1447, 0.0
    %v1464 = vsel %vm1412, %v1448, 0.0
    %v1465 = vsel %vm1413, %v1449, 0.0
    %v1466 = vsel %vm1414, %v1450, 0.0
    %v1467 = vsel %vm1415, %v1451, 0.0
    %v1468 = vsel %vm1416, %v1452, 0.0
    %v1469 = vsel %vm1417, %v1453, 0.0
    %v1470 = vsel %vm1418, %v1454, 0.0
    %v1471 = vsel %vm1419, %v1455, 0.0
    %v1472 = vsel %vm1420, %v1456, 0.0
    %v1473 = vsel %vm1421, %v1457, 0.0
    %v1474 = vsel %vm1422, %v1458, 0.0
    %v1475 = vsel %vm1423, %v1459, 0.0
    %v1476 = vsel %vm1424, %v1460, 0.0
    %v1477 = vadd.f32 %v1377, %v1461
    %v1478 = vadd.f32 %v1378, %v1462
    %v1479 = vadd.f32 %v1379, %v1463
    %v1480 = vadd.f32 %v1380, %v1464
    %v1481 = vadd.f32 %v1381, %v1465
    %v1482 = vadd.f32 %v1382, %v1466
    %v1483 = vadd.f32 %v1383, %v1467
    %v1484 = vadd.f32 %v1384, %v1468
    %v1485 = vadd.f32 %v1385, %v1469
    %v1486 = vadd.f32 %v1386, %v1470
    %v1487 = vadd.f32 %v1387, %v1471
    %v1488 = vadd.f32 %v1388, %v1472
    %v1489 = vadd.f32 %v1389, %v1473
    %v1490 = vadd.f32 %v1390, %v1474
    %v1491 = vadd.f32 %v1391, %v1475
    %v1492 = vadd.f32 %v1392, %v1476
    %vm1493 = vcmp.lt.f32.partialorder %v944, %v893
    %vm1494 = vcmp.lt.f32.partialorder %v944, %v894
    %vm1495 = vcmp.lt.f32.partialorder %v944, %v895
    %vm1496 = vcmp.lt.f32.partialorder %v944, %v896
    %vm1497 = vcmp.lt.f32.partialorder %v944, %v897
    %vm1498 = vcmp.lt.f32.partialorder %v944, %v898
    %vm1499 = vcmp.lt.f32.partialorder %v944, %v899
    %vm1500 = vcmp.lt.f32.partialorder %v944, %v900
    %vm1501 = vcmp.lt.f32.partialorder %v944, %v901
    %vm1502 = vcmp.lt.f32.partialorder %v944, %v902
    %vm1503 = vcmp.lt.f32.partialorder %v944, %v903
    %vm1504 = vcmp.lt.f32.partialorder %v944, %v904
    %vm1505 = vcmp.lt.f32.partialorder %v944, %v905
    %vm1506 = vcmp.lt.f32.partialorder %v944, %v906
    %vm1507 = vcmp.lt.f32.partialorder %v944, %v907
    %vm1508 = vcmp.lt.f32.partialorder %v944, %v908
    %vm1509 = vmand %vm637, %vm1493
    %vm1510 = vmand %vm638, %vm1494
    %vm1511 = vmand %vm639, %vm1495
    %vm1512 = vmand %vm640, %vm1496
    %vm1513 = vmand %vm641, %vm1497
    %vm1514 = vmand %vm642, %vm1498
    %vm1515 = vmand %vm643, %vm1499
    %vm1516 = vmand %vm644, %vm1500
    %vm1517 = vmand %vm645, %vm1501
    %vm1518 = vmand %vm646, %vm1502
    %vm1519 = vmand %vm647, %vm1503
    %vm1520 = vmand %vm648, %vm1504
    %vm1521 = vmand %vm649, %vm1505
    %vm1522 = vmand %vm650, %vm1506
    %vm1523 = vmand %vm651, %vm1507
    %vm1524 = vmand %vm652, %vm1508
    %v1525 = vsel %vm1509, %v1477, 0.0
    %v1526 = vsel %vm1510, %v1478, 0.0
    %v1527 = vsel %vm1511, %v1479, 0.0
    %v1528 = vsel %vm1512, %v1480, 0.0
    %v1529 = vsel %vm1513, %v1481, 0.0
    %v1530 = vsel %vm1514, %v1482, 0.0
    %v1531 = vsel %vm1515, %v1483, 0.0
    %v1532 = vsel %vm1516, %v1484, 0.0
    %v1533 = vsel %vm1517, %v1485, 0.0
    %v1534 = vsel %vm1518, %v1486, 0.0
    %v1535 = vsel %vm1519, %v1487, 0.0
    %v1536 = vsel %vm1520, %v1488, 0.0
    %v1537 = vsel %vm1521, %v1489, 0.0
    %v1538 = vsel %vm1522, %v1490, 0.0
    %v1539 = vsel %vm1523, %v1491, 0.0
    %v1540 = vsel %vm1524, %v1492, 0.0
    %v1541 = vld [vmem:[#allocation2] sm:$0x1]
    %v1542 = vadd.f32 %v1525, %v1526
    %v1543 = vadd.f32 %v1542, %v1527
    %v1544 = vadd.f32 %v1543, %v1528
    %v1545 = vadd.f32 %v1544, %v1529
    %v1546 = vadd.f32 %v1545, %v1530
    %v1547 = vadd.f32 %v1546, %v1531
    %v1548 = vadd.f32 %v1547, %v1532
    %v1549 = vadd.f32 %v1548, %v1533
    %v1550 = vadd.f32 %v1549, %v1534
    %v1551 = vadd.f32 %v1550, %v1535
    %v1552 = vadd.f32 %v1551, %v1536
    %v1553 = vadd.f32 %v1552, %v1537
    %v1554 = vadd.f32 %v1553, %v1538
    %v1555 = vadd.f32 %v1554, %v1539
    %v1556 = vadd.f32 %v1555, %v1540
    %v1557 = vrot.slane %v1556, 4
    %v1558 = vadd.f32 %v1556, %v1557
    %v1559 = vrot.slane %v1558, 2
    %v1560 = vadd.f32 %v1558, %v1559
    %v1561 = vrot.slane %v1560, 1
    %v1562 = vadd.f32 %v1560, %v1561
    %v1563 = vadd.f32 %v1541, %v1562
    %1564 = vst [vmem:[#allocation2] sm:$0x1] %v1563
    // Predicated region
    $region30: #{tpu_custom_call.1} parent=1 // pred_check
      %p1565 = pneg %p24
    $region31: #{tpu_custom_call.1} parent=1 // pred_check_branch
      %1567 = sbr.rel (%p1565) target = $region33
    $region32: #{tpu_custom_call.1} parent=1 // pred_region
      %v1568 = vld [vmem:[#allocation2] sm:$0x1]
      %v1569 = vmul.f32 %v1568, %v33
      %v1570 = vmul.f32 %v1569, 0.8
      %v1571 = vmul.f32 %v1570, %v1569
      %v1572 = vsub.f32 %v1569, %v1571
      %v1573 = vmul.f32 %v1569, 4.85
      %v1574 = vmul.f32 %v1573, %v1569
      %v1575 = vmul.f32 %v1574, %v1569
      %v1576 = vadd.f32 %v1572, %v1575
      %v1577 = vtanh.pop %v1576
      %v1578 = vadd.f32 %v33, 0.0195141
      %v1579 = vrcp.pop %v1578
      %v1580 = vmul.f32 %v1577, %v1579
      %v1581 = vsub.f32 %v35, %v1580
      %v1582 = vrcp.pop %v1581
      %v1583 = vmul.f32 1.0, %v1582
      %1584 = vst [vmem:[#allocation3] sm:$0x1] %v1583
      %1585 = vst [vmem:[#allocation3 + $0x1] sm:$0x1] %v32
    $region33: #{tpu_custom_call.1} parent=1 // pred_fallthru
      _
    // Predicated region
    $region34: #{tpu_custom_call.1} parent=1 // pred_check
      _
    $region35: #{tpu_custom_call.1} parent=1 // pred_check_branch
      %1587 = sbr.rel (0) target = $region37
    $region36: #{tpu_custom_call.1} parent=1 // pred_region
      %s1589 = ssub.s32 32, 32
      %1590 = vsyncadd [#allocation4], %s1589
      %s1592 = sshll.u32 [#allocation3], 4
      %s1593 = int_to_ptr.vmem [resolvable:$true] %s1592
      %1595 = dma.vmem_to_hbm [thread:$0]  %s1593, 32, %s6, [#allocation4]
    $region37: #{tpu_custom_call.1} parent=1 // pred_fallthru
      _
    // Predicated region
    $region38: #{tpu_custom_call.1} parent=1 // pred_check
      _
    $region39: #{tpu_custom_call.1} parent=1 // pred_check_branch
      %1597 = sbr.rel (0) target = $region41
    $region40: #{tpu_custom_call.1} parent=1 // pred_region
      %1598 = dma.done [#allocation4], 32
    $region41: #{tpu_custom_call.1} parent=1 // pred_fallthru
      _
    %1599 = vsyncpa [#allocation4], 1

</llo_original>
